<compile_context>
chip_gen: v7x
topology: tpu7x:2x2x1
jax: 0.10.0
libtpu: 0.0.40
codegen_flags: <defaults>
</compile_context>

<pallas_src>
import functools
import math

import jax
import jax.numpy as jnp
from jax import lax
from jax.experimental import pallas as pl
from jax.experimental.pallas import tpu as pltpu

K = 3            # conv kernel width
LANES = 128      # output slab packed to full lane width
R_HALF = math.sqrt(0.5)
R_THIRD = 1.0 / math.sqrt(3.0)
NEG_INF = -1e30  # additive mask value (fully-masked rows degenerate to uniform)


def _round_up(n, m):
    return ((n + m - 1) // m) * m


# ---------------------------------------------------------------------------
# In-kernel helpers (all dots are 2-D x 2-D or properly batched 3-D einsums)
# ---------------------------------------------------------------------------
def _shift_rows(x, d):
    """y[r] = x[r + d], zero rows where r + d falls outside [0, rows)."""
    if d == 0:
        return x
    n, h = x.shape
    z = jnp.zeros((abs(d), h), x.dtype)
    if d > 0:
        return jnp.concatenate([x[d:, :], z], axis=0)
    return jnp.concatenate([z, x[:n + d, :]], axis=0)


def _glu_conv_rows(h, cw_ref, cb_ref, seq_len, pad_left):
    """Width-K GLU conv over sequences of length `seq_len` stacked on rows.

    h: (N*seq_len, H) f32.  cw_ref: (K, H, 2H) bf16.  cb_ref: (1, 2H) f32.
    Tap k reads neighbour offset d = k - pad_left; sequence edges are masked so
    taps never bleed across stacked-sequence boundaries.  This replaces the
    per-batch lane-axis im2col concatenate of the previous version.
    """
    nl, H = h.shape
    t = lax.broadcasted_iota(jnp.int32, (nl, 1), 0) % seq_len   # pos within seq
    acc = jnp.zeros((nl, 2 * H), jnp.float32) + cb_ref[...]
    for k in range(K):
        d = k - pad_left
        xk = _shift_rows(h, d)
        if d != 0:
            valid = (t + d >= 0) & (t + d < seq_len)
            xk = jnp.where(valid, xk, 0.0)
        acc = acc + jnp.dot(xk.astype(jnp.bfloat16), cw_ref[k],
                            preferred_element_type=jnp.float32)
    return acc[:, :H] * jax.nn.sigmoid(acc[:, H:])               # GLU


def _encode_rows(emb2, seq_len, in_w_ref, in_b_ref, cw_ref, cb_ref):
    """ConvS2S encoder on stacked rows: (N*seq_len, E) bf16 -> memory bank f32."""
    h = jnp.dot(emb2, in_w_ref[...],
                preferred_element_type=jnp.float32) + in_b_ref[...]   # (N*L, H)
    conv = _glu_conv_rows(h, cw_ref, cb_ref, seq_len, pad_left=(K - 1) // 2)
    out = (conv + h) * R_HALF          # residual
    mem = (out + h) * R_HALF           # memory bank
    return mem


def _softmax_last(s):
    m = jnp.max(s, axis=-1, keepdims=True)
    p = jnp.exp(s - m)
    # approx reciprocal runs on the EUP slot; rows are ~normalized (documented
    # deviation from torch.softmax, accepted for performance).
    return p * pl.reciprocal(jnp.sum(p, axis=-1, keepdims=True), approx=True)


# ---------------------------------------------------------------------------
# The single fused kernel: src/knl encoder + decoder + both attentions.
# ---------------------------------------------------------------------------
def _convmodel_kernel(B, Ls, Lk, Lt,
                      len_ref,                       # SMEM (B,) int32
                      enc_emb_ref, tgt_emb_ref,      # bf16 row-stacked embeddings
                      e_in_w, e_in_b, e_cw, e_cb,    # encoder weights
                      d_in_w, d_in_b, d_cw, d_cb, d_ow, d_ob,   # decoder weights
                      o_ref):                        # (B, Lt, PACK) f32 slab
    H = e_in_w.shape[1]

    # ---- encoder: src and knl share weights -> one stacked pass when Ls == Lk
    enc_emb = enc_emb_ref[...]                                   # (B*Ls + B*Lk, E)
    if Ls == Lk:
        mem_all = _encode_rows(enc_emb, Ls, e_in_w, e_in_b, e_cw, e_cb)
        mem_src = mem_all[:B * Ls].reshape(B, Ls, H)
        mem_knl = mem_all[B * Ls:].reshape(B, Lk, H)
    else:
        mem_src = _encode_rows(enc_emb[:B * Ls], Ls,
                               e_in_w, e_in_b, e_cw, e_cb).reshape(B, Ls, H)
        mem_knl = _encode_rows(enc_emb[B * Ls:], Lk,
                               e_in_w, e_in_b, e_cw, e_cb).reshape(B, Lk, H)

    # ---- decoder: linear -> causal GLU conv -> residual ----
    temb = tgt_emb_ref[...]                                      # (B*Lt, E) bf16
    hd = jnp.dot(temb, d_in_w[...],
                 preferred_element_type=jnp.float32) + d_in_b[...]
    conv = _glu_conv_rows(hd, d_cw, d_cb, Lt, pad_left=K - 1)    # causal pad
    q2 = (conv + hd) * R_HALF                                    # (B*Lt, H) f32
    q = q2.reshape(B, Lt, H)
    qs = (q2 * float(H) ** -0.5).astype(jnp.bfloat16).reshape(B, Lt, H)

    # ---- masked attention over the src memory bank ----
    mem_src_b = mem_src.astype(jnp.bfloat16)
    s = jnp.einsum('bqd,bkd->bqk', qs, mem_src_b,
                   preferred_element_type=jnp.float32)           # (B, Lt, Ls)
    kp = lax.broadcasted_iota(jnp.int32, (Lt, Ls), 1)
    s = jnp.stack([jnp.where(kp < len_ref[b], s[b], NEG_INF) for b in range(B)],
                  axis=0)
    p = _softmax_last(s)
    ctx_src = jnp.einsum('bqk,bkd->bqd', p.astype(jnp.bfloat16), mem_src_b,
                         preferred_element_type=jnp.float32)

    # ---- attention over the knowledge memory bank (no length mask, matching
    #      the reference decoder which receives no knl lengths) ----
    mem_knl_b = mem_knl.astype(jnp.bfloat16)
    s2 = jnp.einsum('bqd,bkd->bqk', qs, mem_knl_b,
                    preferred_element_type=jnp.float32)          # (B, Lt, Lk)
    p2 = _softmax_last(s2)
    ctx_knl = jnp.einsum('bqk,bkd->bqd', p2.astype(jnp.bfloat16), mem_knl_b,
                         preferred_element_type=jnp.float32)

    hidden = (q + ctx_src + ctx_knl) * R_THIRD                   # (B, Lt, H)
    dec = (jnp.dot(hidden.reshape(B * Lt, H).astype(jnp.bfloat16), d_ow[...],
                   preferred_element_type=jnp.float32) + d_ob[...]
           ).reshape(B, Lt, H)

    # ---- lane-dense packed output: [dec | attn_std | attn_knl | pad] ----
    pack = o_ref.shape[2]
    parts = [dec, p, p2]
    pad_w = pack - (H + Ls + Lk)
    if pad_w > 0:
        parts.append(jnp.zeros((B, Lt, pad_w), jnp.float32))
    o_ref[...] = jnp.concatenate(parts, axis=2).astype(o_ref.dtype)


def convmodel_pallas(src_lengths, enc_emb2, tgt_emb2, enc_p, dec_p,
                     B, Ls, Lk, Lt):
    H = enc_p["in_w"].shape[1]
    pack = _round_up(H + Ls + Lk, LANES)
    vmem = pl.BlockSpec(memory_space=pltpu.MemorySpace.VMEM)
    smem = pl.BlockSpec(memory_space=pltpu.MemorySpace.SMEM)
    kernel = functools.partial(_convmodel_kernel, B, Ls, Lk, Lt)
    return pl.pallas_call(
        kernel,
        out_shape=jax.ShapeDtypeStruct((B, Lt, pack), jnp.float32),
        in_specs=[smem] + [vmem] * 12,      # grid-less: whole arrays, 1 launch
        out_specs=vmem,
    )(src_lengths.astype(jnp.int32),
      enc_emb2, tgt_emb2,
      enc_p["in_w"], enc_p["in_b"], enc_p["conv_w"], enc_p["conv_b"],
      dec_p["in_w"], dec_p["in_b"], dec_p["conv_w"], dec_p["conv_b"],
      dec_p["out_w"], dec_p["out_b"])


# ---------------------------------------------------------------------------
# Host-side ConvModel (mirror of onmt.models.model.ConvModel.forward)
# ---------------------------------------------------------------------------
@jax.jit
def _convmodel_forward(enc, dec, knl, src, tgt, src_lengths, knl_lengths):
    del knl_lengths   # the concrete knowledge attention applies no knl mask
    tgt = tgt[:-1]
    H = enc["in_w"].shape[1]

    # Embedding lookups stay on the host.
    # TODO(synk): token-id gather has no cheap Pallas TPU equivalent at this
    # size; kept as host-side jnp.take feeding the fused kernel.
    src_tok = jnp.transpose(src[:, :, 0])                        # (B, Ls)
    knl_tok = jnp.transpose(knl[:, :, 0])                        # (B, Lk)
    tgt_tok = jnp.transpose(tgt[:, :, 0])                        # (B, Lt)
    src_emb = jnp.take(enc["emb"], src_tok, axis=0)              # (B, Ls, E)
    knl_emb = jnp.take(enc["emb"], knl_tok, axis=0)              # shared encoder
    tgt_emb = jnp.take(dec["emb"], tgt_tok, axis=0)              # (B, Lt, E)

    B, Ls, E = src_emb.shape
    Lk = knl_emb.shape[1]
    Lt = tgt_emb.shape[1]

    # Row-stacked, bf16 MXU operands (halves embedding DMA bytes).
    enc_emb2 = jnp.concatenate(
        [src_emb.reshape(B * Ls, E), knl_emb.reshape(B * Lk, E)],
        axis=0).astype(jnp.bfloat16)
    tgt_emb2 = tgt_emb.reshape(B * Lt, E).astype(jnp.bfloat16)

    packed = convmodel_pallas(src_lengths, enc_emb2, tgt_emb2,
                              enc, dec, B, Ls, Lk, Lt)
    dec_out = packed[..., :H]
    attns = {"std": packed[..., H:H + Ls],
             "knl": packed[..., H + Ls:H + Ls + Lk]}
    return dec_out, attns


class ConvModel:
    """Mirror of onmt.models.model.ConvModel.forward.

    The injected encoder / decoder are concretized as ConvS2S-style parameter
    dicts; the whole forward (both encoder passes, decoder conv and the two
    attentions) executes as a single fused Pallas kernel.  decoder.init_state
    is implicit inside the fusion (no state escapes to HBM).
    """

    def __init__(self, enc_params, dec_params):
        def prep(p, has_out):
            q = {"emb": p["emb"],
                 "in_w": p["in_w"].astype(jnp.bfloat16),     # MXU operands: bf16
                 "in_b": p["in_b"],                          # biases stay f32
                 "conv_w": p["conv_w"].astype(jnp.bfloat16), # (K, H, 2H)
                 "conv_b": p["conv_b"]}
            if has_out:
                q["out_w"] = p["out_w"].astype(jnp.bfloat16)
                q["out_b"] = p["out_b"]
            return q
        self.enc = prep(enc_params, False)
        self.dec = prep(dec_params, True)

    def __call__(self, knl, src, tgt, src_lengths, knl_lengths):
        return _convmodel_forward(self.enc, self.dec, knl, src, tgt,
                                  src_lengths, knl_lengths)


# ---------------------------------------------------------------------------
# Deterministic parameter init + run
# ---------------------------------------------------------------------------
def make_params(key, vocab, E, H):
    ks = jax.random.split(key, 10)
    n = lambda k, s: (0.02 * jax.random.normal(k, s)).astype(jnp.float32)
    enc = {
        "emb": n(ks[0], (vocab, E)),
        "in_w": n(ks[1], (E, H)), "in_b": jnp.zeros((1, H), jnp.float32),
        "conv_w": n(ks[2], (K, H, 2 * H)), "conv_b": jnp.zeros((1, 2 * H), jnp.float32),
    }
    dec = {
        "emb": n(ks[3], (vocab, E)),
        "in_w": n(ks[4], (E, H)), "in_b": jnp.zeros((1, H), jnp.float32),
        "conv_w": n(ks[5], (K, H, 2 * H)), "conv_b": jnp.zeros((1, 2 * H), jnp.float32),
        "out_w": n(ks[6], (H, H)), "out_b": jnp.zeros((1, H), jnp.float32),
    }
    return enc, dec


if __name__ == "__main__":
    VOCAB, E, H = 50, 32, 32
    B, L_SRC, L_KNL, L_TGT = 2, 16, 16, 9   # tgt[:-1] -> 8 decode steps

    key = jax.random.PRNGKey(0)
    k_par, k_src, k_knl, k_tgt = jax.random.split(key, 4)
    enc_params, dec_params = make_params(k_par, VOCAB, E, H)

    # OpenNMT token layout: (len, batch, 1) int ids
    src = jax.random.randint(k_src, (L_SRC, B, 1), 0, VOCAB, dtype=jnp.int32)
    knl = jax.random.randint(k_knl, (L_KNL, B, 1), 0, VOCAB, dtype=jnp.int32)
    tgt = jax.random.randint(k_tgt, (L_TGT, B, 1), 0, VOCAB, dtype=jnp.int32)
    src_lengths = jnp.array([16, 12], dtype=jnp.int32)
    knl_lengths = jnp.array([16, 10], dtype=jnp.int32)

    model = ConvModel(enc_params, dec_params)
    dec_out, attns = model(knl, src, tgt, src_lengths, knl_lengths)

    jax.block_until_ready(dec_out)
    jax.block_until_ready(attns["std"])
    jax.block_until_ready(attns["knl"])

    assert dec_out.shape == (B, L_TGT - 1, H)
    assert attns["std"].shape == (B, L_TGT - 1, L_SRC)
    assert attns["knl"].shape == (B, L_TGT - 1, L_KNL)
    assert bool(jnp.all(jnp.isfinite(dec_out)))
    print("KERNEL_OK")
</pallas_src>

<mosaic_0001>
module attributes {stable_mosaic.version = 11 : i64} {
  func.func @_convmodel_kernel(%arg0: memref<2xi32, #tpu.memory_space<smem>>, %arg1: memref<64x32xbf16, #tpu.memory_space<vmem>>, %arg2: memref<16x32xbf16, #tpu.memory_space<vmem>>, %arg3: memref<32x32xbf16, #tpu.memory_space<vmem>>, %arg4: memref<1x32xf32, #tpu.memory_space<vmem>>, %arg5: memref<3x32x64xbf16, #tpu.memory_space<vmem>>, %arg6: memref<1x64xf32, #tpu.memory_space<vmem>>, %arg7: memref<32x32xbf16, #tpu.memory_space<vmem>>, %arg8: memref<1x32xf32, #tpu.memory_space<vmem>>, %arg9: memref<3x32x64xbf16, #tpu.memory_space<vmem>>, %arg10: memref<1x64xf32, #tpu.memory_space<vmem>>, %arg11: memref<32x32xbf16, #tpu.memory_space<vmem>>, %arg12: memref<1x32xf32, #tpu.memory_space<vmem>>, %arg13: memref<2x8x128xf32, #tpu.memory_space<vmem>>) attributes {dimension_semantics = [], scalar_prefetch = 0 : i64, scratch_operands = 0 : i64, tpu.core_type = #tpu.core_type<tc>} {
    %c0 = arith.constant 0 : index
    %c0_0 = arith.constant 0 : index
    %0 = vector.load %arg1[%c0, %c0_0] : memref<64x32xbf16, #tpu.memory_space<vmem>>, vector<64x32xbf16>
    %c0_1 = arith.constant 0 : index
    %c0_2 = arith.constant 0 : index
    %1 = vector.load %arg3[%c0_1, %c0_2] : memref<32x32xbf16, #tpu.memory_space<vmem>>, vector<32x32xbf16>
    %cst = arith.constant dense<0.000000e+00> : vector<64x32xf32>
    %2 = tpu.matmul %0, %1, %cst {dimension_numbers = #tpu.dot_dimension_numbers<[1], [0], [0], [1], [0, 0, 1, 1], [], []>} : vector<64x32xbf16>, vector<32x32xbf16>, vector<64x32xf32> -> vector<64x32xf32>
    %c0_3 = arith.constant 0 : index
    %c0_4 = arith.constant 0 : index
    %3 = vector.load %arg4[%c0_3, %c0_4] : memref<1x32xf32, #tpu.memory_space<vmem>>, vector<1x32xf32>
    %4 = vector.broadcast %3 : vector<1x32xf32> to vector<64x32xf32>
    %5 = arith.addf %2, %4 : vector<64x32xf32>
    %6 = tpu.iota {dimensions = array<i32: 0>} : vector<64x1xi32>
    %c16_i32 = arith.constant 16 : i32
    %c0_i32 = arith.constant 0 : i32
    %7 = arith.cmpi eq, %c16_i32, %c0_i32 : i32
    %c1_i32 = arith.constant 1 : i32
    %8 = arith.select %7, %c1_i32, %c16_i32 : i32
    %9 = vector.broadcast %8 : i32 to vector<64x1xi32>
    %10 = arith.remsi %6, %9 : vector<64x1xi32>
    %c0_i32_5 = arith.constant 0 : i32
    %11 = vector.broadcast %c0_i32_5 : i32 to vector<64x1xi32>
    %12 = arith.cmpi ne, %10, %11 : vector<64x1xi32>
    %c0_i32_6 = arith.constant 0 : i32
    %13 = vector.broadcast %c0_i32_6 : i32 to vector<64x1xi32>
    %14 = arith.cmpi slt, %10, %13 : vector<64x1xi32>
    %c0_i32_7 = arith.constant 0 : i32
    %15 = arith.cmpi slt, %8, %c0_i32_7 : i32
    %16 = vector.broadcast %15 : i1 to vector<64x1xi1>
    %17 = vector.broadcast %16 : vector<64x1xi1> to vector<64x1xi1>
    %18 = arith.xori %14, %17 : vector<64x1xi1>
    %19 = arith.andi %18, %12 : vector<64x1xi1>
    %20 = vector.broadcast %8 : i32 to vector<64x1xi32>
    %21 = arith.addi %10, %20 : vector<64x1xi32>
    %22 = arith.select %19, %21, %10 : vector<64x1xi1>, vector<64x1xi32>
    %cst_8 = arith.constant 0.000000e+00 : f32
    %23 = vector.broadcast %cst_8 : f32 to vector<64x64xf32>
    %c0_9 = arith.constant 0 : index
    %c0_10 = arith.constant 0 : index
    %24 = vector.load %arg6[%c0_9, %c0_10] : memref<1x64xf32, #tpu.memory_space<vmem>>, vector<1x64xf32>
    %25 = vector.broadcast %24 : vector<1x64xf32> to vector<64x64xf32>
    %26 = arith.addf %23, %25 : vector<64x64xf32>
    %cst_11 = arith.constant 0.000000e+00 : f32
    %27 = vector.broadcast %cst_11 : f32 to vector<1x32xf32>
    %28 = vector.extract_strided_slice %5 {offsets = [0, 0], sizes = [63, 32], strides = [1, 1]} : vector<64x32xf32> to vector<63x32xf32>
    %29 = tpu.concatenate %27, %28 in 0 : vector<1x32xf32>, vector<63x32xf32> -> vector<64x32xf32>
    %c-1_i32 = arith.constant -1 : i32
    %30 = vector.broadcast %c-1_i32 : i32 to vector<64x1xi32>
    %31 = arith.addi %22, %30 : vector<64x1xi32>
    %c0_i32_12 = arith.constant 0 : i32
    %32 = vector.broadcast %c0_i32_12 : i32 to vector<64x1xi32>
    %33 = arith.cmpi sge, %31, %32 : vector<64x1xi32>
    %c-1_i32_13 = arith.constant -1 : i32
    %34 = vector.broadcast %c-1_i32_13 : i32 to vector<64x1xi32>
    %35 = arith.addi %22, %34 : vector<64x1xi32>
    %c16_i32_14 = arith.constant 16 : i32
    %36 = vector.broadcast %c16_i32_14 : i32 to vector<64x1xi32>
    %37 = arith.cmpi slt, %35, %36 : vector<64x1xi32>
    %38 = arith.andi %33, %37 : vector<64x1xi1>
    %cst_15 = arith.constant 0.000000e+00 : f32
    %39 = vector.shape_cast %38 : vector<64x1xi1> to vector<64x1xi1>
    %40 = vector.broadcast %39 : vector<64x1xi1> to vector<64x32xi1>
    %41 = vector.broadcast %cst_15 : f32 to vector<64x32xf32>
    %42 = arith.select %40, %29, %41 : vector<64x32xi1>, vector<64x32xf32>
    %43 = arith.truncf %42 : vector<64x32xf32> to vector<64x32xbf16>
    %c0_16 = arith.constant 0 : index
    %c0_17 = arith.constant 0 : index
    %c0_18 = arith.constant 0 : index
    %44 = vector.load %arg5[%c0_16, %c0_17, %c0_18] : memref<3x32x64xbf16, #tpu.memory_space<vmem>>, vector<1x32x64xbf16>
    %45 = vector.shape_cast %44 : vector<1x32x64xbf16> to vector<32x64xbf16>
    %cst_19 = arith.constant dense<0.000000e+00> : vector<64x64xf32>
    %46 = tpu.matmul %43, %45, %cst_19 {dimension_numbers = #tpu.dot_dimension_numbers<[1], [0], [0], [1], [0, 0, 1, 1], [], []>} : vector<64x32xbf16>, vector<32x64xbf16>, vector<64x64xf32> -> vector<64x64xf32>
    %47 = arith.addf %26, %46 : vector<64x64xf32>
    %48 = arith.truncf %5 : vector<64x32xf32> to vector<64x32xbf16>
    %c1 = arith.constant 1 : index
    %c0_20 = arith.constant 0 : index
    %c0_21 = arith.constant 0 : index
    %49 = vector.load %arg5[%c1, %c0_20, %c0_21] : memref<3x32x64xbf16, #tpu.memory_space<vmem>>, vector<1x32x64xbf16>
    %50 = vector.shape_cast %49 : vector<1x32x64xbf16> to vector<32x64xbf16>
    %cst_22 = arith.constant dense<0.000000e+00> : vector<64x64xf32>
    %51 = tpu.matmul %48, %50, %cst_22 {dimension_numbers = #tpu.dot_dimension_numbers<[1], [0], [0], [1], [0, 0, 1, 1], [], []>} : vector<64x32xbf16>, vector<32x64xbf16>, vector<64x64xf32> -> vector<64x64xf32>
    %52 = arith.addf %47, %51 : vector<64x64xf32>
    %cst_23 = arith.constant 0.000000e+00 : f32
    %53 = vector.broadcast %cst_23 : f32 to vector<1x32xf32>
    %54 = vector.extract_strided_slice %5 {offsets = [1, 0], sizes = [63, 32], strides = [1, 1]} : vector<64x32xf32> to vector<63x32xf32>
    %55 = tpu.concatenate %54, %53 in 0 : vector<63x32xf32>, vector<1x32xf32> -> vector<64x32xf32>
    %c1_i32_24 = arith.constant 1 : i32
    %56 = vector.broadcast %c1_i32_24 : i32 to vector<64x1xi32>
    %57 = arith.addi %22, %56 : vector<64x1xi32>
    %c0_i32_25 = arith.constant 0 : i32
    %58 = vector.broadcast %c0_i32_25 : i32 to vector<64x1xi32>
    %59 = arith.cmpi sge, %57, %58 : vector<64x1xi32>
    %c1_i32_26 = arith.constant 1 : i32
    %60 = vector.broadcast %c1_i32_26 : i32 to vector<64x1xi32>
    %61 = arith.addi %22, %60 : vector<64x1xi32>
    %c16_i32_27 = arith.constant 16 : i32
    %62 = vector.broadcast %c16_i32_27 : i32 to vector<64x1xi32>
    %63 = arith.cmpi slt, %61, %62 : vector<64x1xi32>
    %64 = arith.andi %59, %63 : vector<64x1xi1>
    %cst_28 = arith.constant 0.000000e+00 : f32
    %65 = vector.shape_cast %64 : vector<64x1xi1> to vector<64x1xi1>
    %66 = vector.broadcast %65 : vector<64x1xi1> to vector<64x32xi1>
    %67 = vector.broadcast %cst_28 : f32 to vector<64x32xf32>
    %68 = arith.select %66, %55, %67 : vector<64x32xi1>, vector<64x32xf32>
    %69 = arith.truncf %68 : vector<64x32xf32> to vector<64x32xbf16>
    %c2 = arith.constant 2 : index
    %c0_29 = arith.constant 0 : index
    %c0_30 = arith.constant 0 : index
    %70 = vector.load %arg5[%c2, %c0_29, %c0_30] : memref<3x32x64xbf16, #tpu.memory_space<vmem>>, vector<1x32x64xbf16>
    %71 = vector.shape_cast %70 : vector<1x32x64xbf16> to vector<32x64xbf16>
    %cst_31 = arith.constant dense<0.000000e+00> : vector<64x64xf32>
    %72 = tpu.matmul %69, %71, %cst_31 {dimension_numbers = #tpu.dot_dimension_numbers<[1], [0], [0], [1], [0, 0, 1, 1], [], []>} : vector<64x32xbf16>, vector<32x64xbf16>, vector<64x64xf32> -> vector<64x64xf32>
    %73 = arith.addf %52, %72 : vector<64x64xf32>
    %74 = vector.extract_strided_slice %73 {offsets = [0, 0], sizes = [64, 32], strides = [1, 1]} : vector<64x64xf32> to vector<64x32xf32>
    %75 = vector.extract_strided_slice %73 {offsets = [0, 32], sizes = [64, 32], strides = [1, 1]} : vector<64x64xf32> to vector<64x32xf32>
    %76 = arith.negf %75 : vector<64x32xf32>
    %77 = math.exp %76 : vector<64x32xf32>
    %cst_32 = arith.constant 1.000000e+00 : f32
    %78 = vector.broadcast %cst_32 : f32 to vector<64x32xf32>
    %79 = arith.addf %78, %77 : vector<64x32xf32>
    %80 = arith.divf %78, %79 : vector<64x32xf32>
    %81 = arith.mulf %74, %80 : vector<64x32xf32>
    %82 = arith.addf %81, %5 : vector<64x32xf32>
    %cst_33 = arith.constant 0.707106769 : f32
    %83 = vector.broadcast %cst_33 : f32 to vector<64x32xf32>
    %84 = arith.mulf %82, %83 : vector<64x32xf32>
    %85 = arith.addf %84, %5 : vector<64x32xf32>
    %cst_34 = arith.constant 0.707106769 : f32
    %86 = vector.broadcast %cst_34 : f32 to vector<64x32xf32>
    %87 = arith.mulf %85, %86 : vector<64x32xf32>
    %88 = vector.extract_strided_slice %87 {offsets = [0, 0], sizes = [32, 32], strides = [1, 1]} : vector<64x32xf32> to vector<32x32xf32>
    %89 = vector.shape_cast %88 : vector<32x32xf32> to vector<2x16x32xf32>
    %90 = vector.extract_strided_slice %87 {offsets = [32, 0], sizes = [32, 32], strides = [1, 1]} : vector<64x32xf32> to vector<32x32xf32>
    %91 = vector.shape_cast %90 : vector<32x32xf32> to vector<2x16x32xf32>
    %c0_35 = arith.constant 0 : index
    %c0_36 = arith.constant 0 : index
    %92 = vector.load %arg2[%c0_35, %c0_36] : memref<16x32xbf16, #tpu.memory_space<vmem>>, vector<16x32xbf16>
    %c0_37 = arith.constant 0 : index
    %c0_38 = arith.constant 0 : index
    %93 = vector.load %arg7[%c0_37, %c0_38] : memref<32x32xbf16, #tpu.memory_space<vmem>>, vector<32x32xbf16>
    %cst_39 = arith.constant dense<0.000000e+00> : vector<16x32xf32>
    %94 = tpu.matmul %92, %93, %cst_39 {dimension_numbers = #tpu.dot_dimension_numbers<[1], [0], [0], [1], [0, 0, 1, 1], [], []>} : vector<16x32xbf16>, vector<32x32xbf16>, vector<16x32xf32> -> vector<16x32xf32>
    %c0_40 = arith.constant 0 : index
    %c0_41 = arith.constant 0 : index
    %95 = vector.load %arg8[%c0_40, %c0_41] : memref<1x32xf32, #tpu.memory_space<vmem>>, vector<1x32xf32>
    %96 = vector.broadcast %95 : vector<1x32xf32> to vector<16x32xf32>
    %97 = arith.addf %94, %96 : vector<16x32xf32>
    %98 = tpu.iota {dimensions = array<i32: 0>} : vector<16x1xi32>
    %c8_i32 = arith.constant 8 : i32
    %c0_i32_42 = arith.constant 0 : i32
    %99 = arith.cmpi eq, %c8_i32, %c0_i32_42 : i32
    %c1_i32_43 = arith.constant 1 : i32
    %100 = arith.select %99, %c1_i32_43, %c8_i32 : i32
    %101 = vector.broadcast %100 : i32 to vector<16x1xi32>
    %102 = arith.remsi %98, %101 : vector<16x1xi32>
    %c0_i32_44 = arith.constant 0 : i32
    %103 = vector.broadcast %c0_i32_44 : i32 to vector<16x1xi32>
    %104 = arith.cmpi ne, %102, %103 : vector<16x1xi32>
    %c0_i32_45 = arith.constant 0 : i32
    %105 = vector.broadcast %c0_i32_45 : i32 to vector<16x1xi32>
    %106 = arith.cmpi slt, %102, %105 : vector<16x1xi32>
    %c0_i32_46 = arith.constant 0 : i32
    %107 = arith.cmpi slt, %100, %c0_i32_46 : i32
    %108 = vector.broadcast %107 : i1 to vector<16x1xi1>
    %109 = vector.broadcast %108 : vector<16x1xi1> to vector<16x1xi1>
    %110 = arith.xori %106, %109 : vector<16x1xi1>
    %111 = arith.andi %110, %104 : vector<16x1xi1>
    %112 = vector.broadcast %100 : i32 to vector<16x1xi32>
    %113 = arith.addi %102, %112 : vector<16x1xi32>
    %114 = arith.select %111, %113, %102 : vector<16x1xi1>, vector<16x1xi32>
    %cst_47 = arith.constant 0.000000e+00 : f32
    %115 = vector.broadcast %cst_47 : f32 to vector<16x64xf32>
    %c0_48 = arith.constant 0 : index
    %c0_49 = arith.constant 0 : index
    %116 = vector.load %arg10[%c0_48, %c0_49] : memref<1x64xf32, #tpu.memory_space<vmem>>, vector<1x64xf32>
    %117 = vector.broadcast %116 : vector<1x64xf32> to vector<16x64xf32>
    %118 = arith.addf %115, %117 : vector<16x64xf32>
    %cst_50 = arith.constant 0.000000e+00 : f32
    %119 = vector.broadcast %cst_50 : f32 to vector<2x32xf32>
    %120 = vector.extract_strided_slice %97 {offsets = [0, 0], sizes = [14, 32], strides = [1, 1]} : vector<16x32xf32> to vector<14x32xf32>
    %121 = tpu.concatenate %119, %120 in 0 : vector<2x32xf32>, vector<14x32xf32> -> vector<16x32xf32>
    %c-2_i32 = arith.constant -2 : i32
    %122 = vector.broadcast %c-2_i32 : i32 to vector<16x1xi32>
    %123 = arith.addi %114, %122 : vector<16x1xi32>
    %c0_i32_51 = arith.constant 0 : i32
    %124 = vector.broadcast %c0_i32_51 : i32 to vector<16x1xi32>
    %125 = arith.cmpi sge, %123, %124 : vector<16x1xi32>
    %c-2_i32_52 = arith.constant -2 : i32
    %126 = vector.broadcast %c-2_i32_52 : i32 to vector<16x1xi32>
    %127 = arith.addi %114, %126 : vector<16x1xi32>
    %c8_i32_53 = arith.constant 8 : i32
    %128 = vector.broadcast %c8_i32_53 : i32 to vector<16x1xi32>
    %129 = arith.cmpi slt, %127, %128 : vector<16x1xi32>
    %130 = arith.andi %125, %129 : vector<16x1xi1>
    %cst_54 = arith.constant 0.000000e+00 : f32
    %131 = vector.shape_cast %130 : vector<16x1xi1> to vector<16x1xi1>
    %132 = vector.broadcast %131 : vector<16x1xi1> to vector<16x32xi1>
    %133 = vector.broadcast %cst_54 : f32 to vector<16x32xf32>
    %134 = arith.select %132, %121, %133 : vector<16x32xi1>, vector<16x32xf32>
    %135 = arith.truncf %134 : vector<16x32xf32> to vector<16x32xbf16>
    %c0_55 = arith.constant 0 : index
    %c0_56 = arith.constant 0 : index
    %c0_57 = arith.constant 0 : index
    %136 = vector.load %arg9[%c0_55, %c0_56, %c0_57] : memref<3x32x64xbf16, #tpu.memory_space<vmem>>, vector<1x32x64xbf16>
    %137 = vector.shape_cast %136 : vector<1x32x64xbf16> to vector<32x64xbf16>
    %cst_58 = arith.constant dense<0.000000e+00> : vector<16x64xf32>
    %138 = tpu.matmul %135, %137, %cst_58 {dimension_numbers = #tpu.dot_dimension_numbers<[1], [0], [0], [1], [0, 0, 1, 1], [], []>} : vector<16x32xbf16>, vector<32x64xbf16>, vector<16x64xf32> -> vector<16x64xf32>
    %139 = arith.addf %118, %138 : vector<16x64xf32>
    %cst_59 = arith.constant 0.000000e+00 : f32
    %140 = vector.broadcast %cst_59 : f32 to vector<1x32xf32>
    %141 = vector.extract_strided_slice %97 {offsets = [0, 0], sizes = [15, 32], strides = [1, 1]} : vector<16x32xf32> to vector<15x32xf32>
    %142 = tpu.concatenate %140, %141 in 0 : vector<1x32xf32>, vector<15x32xf32> -> vector<16x32xf32>
    %c-1_i32_60 = arith.constant -1 : i32
    %143 = vector.broadcast %c-1_i32_60 : i32 to vector<16x1xi32>
    %144 = arith.addi %114, %143 : vector<16x1xi32>
    %c0_i32_61 = arith.constant 0 : i32
    %145 = vector.broadcast %c0_i32_61 : i32 to vector<16x1xi32>
    %146 = arith.cmpi sge, %144, %145 : vector<16x1xi32>
    %c-1_i32_62 = arith.constant -1 : i32
    %147 = vector.broadcast %c-1_i32_62 : i32 to vector<16x1xi32>
    %148 = arith.addi %114, %147 : vector<16x1xi32>
    %c8_i32_63 = arith.constant 8 : i32
    %149 = vector.broadcast %c8_i32_63 : i32 to vector<16x1xi32>
    %150 = arith.cmpi slt, %148, %149 : vector<16x1xi32>
    %151 = arith.andi %146, %150 : vector<16x1xi1>
    %cst_64 = arith.constant 0.000000e+00 : f32
    %152 = vector.shape_cast %151 : vector<16x1xi1> to vector<16x1xi1>
    %153 = vector.broadcast %152 : vector<16x1xi1> to vector<16x32xi1>
    %154 = vector.broadcast %cst_64 : f32 to vector<16x32xf32>
    %155 = arith.select %153, %142, %154 : vector<16x32xi1>, vector<16x32xf32>
    %156 = arith.truncf %155 : vector<16x32xf32> to vector<16x32xbf16>
    %c1_65 = arith.constant 1 : index
    %c0_66 = arith.constant 0 : index
    %c0_67 = arith.constant 0 : index
    %157 = vector.load %arg9[%c1_65, %c0_66, %c0_67] : memref<3x32x64xbf16, #tpu.memory_space<vmem>>, vector<1x32x64xbf16>
    %158 = vector.shape_cast %157 : vector<1x32x64xbf16> to vector<32x64xbf16>
    %cst_68 = arith.constant dense<0.000000e+00> : vector<16x64xf32>
    %159 = tpu.matmul %156, %158, %cst_68 {dimension_numbers = #tpu.dot_dimension_numbers<[1], [0], [0], [1], [0, 0, 1, 1], [], []>} : vector<16x32xbf16>, vector<32x64xbf16>, vector<16x64xf32> -> vector<16x64xf32>
    %160 = arith.addf %139, %159 : vector<16x64xf32>
    %161 = arith.truncf %97 : vector<16x32xf32> to vector<16x32xbf16>
    %c2_69 = arith.constant 2 : index
    %c0_70 = arith.constant 0 : index
    %c0_71 = arith.constant 0 : index
    %162 = vector.load %arg9[%c2_69, %c0_70, %c0_71] : memref<3x32x64xbf16, #tpu.memory_space<vmem>>, vector<1x32x64xbf16>
    %163 = vector.shape_cast %162 : vector<1x32x64xbf16> to vector<32x64xbf16>
    %cst_72 = arith.constant dense<0.000000e+00> : vector<16x64xf32>
    %164 = tpu.matmul %161, %163, %cst_72 {dimension_numbers = #tpu.dot_dimension_numbers<[1], [0], [0], [1], [0, 0, 1, 1], [], []>} : vector<16x32xbf16>, vector<32x64xbf16>, vector<16x64xf32> -> vector<16x64xf32>
    %165 = arith.addf %160, %164 : vector<16x64xf32>
    %166 = vector.extract_strided_slice %165 {offsets = [0, 0], sizes = [16, 32], strides = [1, 1]} : vector<16x64xf32> to vector<16x32xf32>
    %167 = vector.extract_strided_slice %165 {offsets = [0, 32], sizes = [16, 32], strides = [1, 1]} : vector<16x64xf32> to vector<16x32xf32>
    %168 = arith.negf %167 : vector<16x32xf32>
    %169 = math.exp %168 : vector<16x32xf32>
    %cst_73 = arith.constant 1.000000e+00 : f32
    %170 = vector.broadcast %cst_73 : f32 to vector<16x32xf32>
    %171 = arith.addf %170, %169 : vector<16x32xf32>
    %172 = arith.divf %170, %171 : vector<16x32xf32>
    %173 = arith.mulf %166, %172 : vector<16x32xf32>
    %174 = arith.addf %173, %97 : vector<16x32xf32>
    %cst_74 = arith.constant 0.707106769 : f32
    %175 = vector.broadcast %cst_74 : f32 to vector<16x32xf32>
    %176 = arith.mulf %174, %175 : vector<16x32xf32>
    %177 = vector.shape_cast %176 : vector<16x32xf32> to vector<2x8x32xf32>
    %cst_75 = arith.constant 0.176776692 : f32
    %178 = vector.broadcast %cst_75 : f32 to vector<16x32xf32>
    %179 = arith.mulf %176, %178 : vector<16x32xf32>
    %180 = arith.truncf %179 : vector<16x32xf32> to vector<16x32xbf16>
    %181 = vector.shape_cast %180 : vector<16x32xbf16> to vector<2x8x32xbf16>
    %182 = arith.truncf %89 : vector<2x16x32xf32> to vector<2x16x32xbf16>
    "tpu.trace_start"() <{level = 10 : i32, message = "bqd,bkd->bqk"}> : () -> ()
    %cst_76 = arith.constant dense<0.000000e+00> : vector<2x8x16xf32>
    %183 = tpu.matmul %181, %182, %cst_76 {dimension_numbers = #tpu.dot_dimension_numbers<[2], [2], [1], [1], [0, 0, 0, 1, 1, 1], [0], [0]>} : vector<2x8x32xbf16>, vector<2x16x32xbf16>, vector<2x8x16xf32> -> vector<2x8x16xf32>
    "tpu.trace_stop"() : () -> ()
    %184 = tpu.iota {dimensions = array<i32: 1>} : vector<8x16xi32>
    %c0_77 = arith.constant 0 : index
    %185 = memref.load %arg0[%c0_77] : memref<2xi32, #tpu.memory_space<smem>>
    %186 = vector.broadcast %185 : i32 to vector<8x16xi32>
    %187 = arith.cmpi slt, %184, %186 : vector<8x16xi32>
    %188 = vector.extract_strided_slice %183 {offsets = [0, 0, 0], sizes = [1, 8, 16], strides = [1, 1, 1]} : vector<2x8x16xf32> to vector<1x8x16xf32>
    %189 = vector.shape_cast %188 : vector<1x8x16xf32> to vector<8x16xf32>
    %cst_78 = arith.constant -1.000000e+30 : f32
    %190 = vector.broadcast %cst_78 : f32 to vector<8x16xf32>
    %191 = arith.select %187, %189, %190 : vector<8x16xi1>, vector<8x16xf32>
    %c1_79 = arith.constant 1 : index
    %192 = memref.load %arg0[%c1_79] : memref<2xi32, #tpu.memory_space<smem>>
    %193 = vector.broadcast %192 : i32 to vector<8x16xi32>
    %194 = arith.cmpi slt, %184, %193 : vector<8x16xi32>
    %195 = vector.extract_strided_slice %183 {offsets = [1, 0, 0], sizes = [1, 8, 16], strides = [1, 1, 1]} : vector<2x8x16xf32> to vector<1x8x16xf32>
    %196 = vector.shape_cast %195 : vector<1x8x16xf32> to vector<8x16xf32>
    %cst_80 = arith.constant -1.000000e+30 : f32
    %197 = vector.broadcast %cst_80 : f32 to vector<8x16xf32>
    %198 = arith.select %194, %196, %197 : vector<8x16xi1>, vector<8x16xf32>
    %199 = vector.shape_cast %191 : vector<8x16xf32> to vector<1x8x16xf32>
    %200 = vector.shape_cast %198 : vector<8x16xf32> to vector<1x8x16xf32>
    %201 = tpu.concatenate %199, %200 in 0 : vector<1x8x16xf32>, vector<1x8x16xf32> -> vector<2x8x16xf32>
    %cst_81 = arith.constant dense<0xFF800000> : vector<2x8xf32>
    %202 = vector.multi_reduction <maximumf>, %201, %cst_81 [2] : vector<2x8x16xf32> to vector<2x8xf32>
    %203 = vector.shape_cast %202 : vector<2x8xf32> to vector<2x8x1xf32>
    %204 = vector.broadcast %203 : vector<2x8x1xf32> to vector<2x8x16xf32>
    %205 = arith.subf %201, %204 : vector<2x8x16xf32>
    %206 = math.exp %205 : vector<2x8x16xf32>
    %cst_82 = arith.constant dense<0.000000e+00> : vector<2x8xf32>
    %207 = vector.multi_reduction <add>, %206, %cst_82 [2] : vector<2x8x16xf32> to vector<2x8xf32>
    %208 = vector.shape_cast %207 : vector<2x8xf32> to vector<2x8x1xf32>
    %209 = tpu.reciprocal %208 {approx = true} : vector<2x8x1xf32> -> vector<2x8x1xf32>
    %210 = vector.broadcast %209 : vector<2x8x1xf32> to vector<2x8x16xf32>
    %211 = arith.mulf %206, %210 : vector<2x8x16xf32>
    %212 = arith.truncf %211 : vector<2x8x16xf32> to vector<2x8x16xbf16>
    "tpu.trace_start"() <{level = 10 : i32, message = "bqk,bkd->bqd"}> : () -> ()
    %cst_83 = arith.constant dense<0.000000e+00> : vector<2x8x32xf32>
    %213 = tpu.matmul %212, %182, %cst_83 {dimension_numbers = #tpu.dot_dimension_numbers<[2], [1], [1], [2], [0, 0, 0, 1, 1, 2], [0], [0]>} : vector<2x8x16xbf16>, vector<2x16x32xbf16>, vector<2x8x32xf32> -> vector<2x8x32xf32>
    "tpu.trace_stop"() : () -> ()
    %214 = arith.truncf %91 : vector<2x16x32xf32> to vector<2x16x32xbf16>
    "tpu.trace_start"() <{level = 10 : i32, message = "bqd,bkd->bqk"}> : () -> ()
    %cst_84 = arith.constant dense<0.000000e+00> : vector<2x8x16xf32>
    %215 = tpu.matmul %181, %214, %cst_84 {dimension_numbers = #tpu.dot_dimension_numbers<[2], [2], [1], [1], [0, 0, 0, 1, 1, 1], [0], [0]>} : vector<2x8x32xbf16>, vector<2x16x32xbf16>, vector<2x8x16xf32> -> vector<2x8x16xf32>
    "tpu.trace_stop"() : () -> ()
    %cst_85 = arith.constant dense<0xFF800000> : vector<2x8xf32>
    %216 = vector.multi_reduction <maximumf>, %215, %cst_85 [2] : vector<2x8x16xf32> to vector<2x8xf32>
    %217 = vector.shape_cast %216 : vector<2x8xf32> to vector<2x8x1xf32>
    %218 = vector.broadcast %217 : vector<2x8x1xf32> to vector<2x8x16xf32>
    %219 = arith.subf %215, %218 : vector<2x8x16xf32>
    %220 = math.exp %219 : vector<2x8x16xf32>
    %cst_86 = arith.constant dense<0.000000e+00> : vector<2x8xf32>
    %221 = vector.multi_reduction <add>, %220, %cst_86 [2] : vector<2x8x16xf32> to vector<2x8xf32>
    %222 = vector.shape_cast %221 : vector<2x8xf32> to vector<2x8x1xf32>
    %223 = tpu.reciprocal %222 {approx = true} : vector<2x8x1xf32> -> vector<2x8x1xf32>
    %224 = vector.broadcast %223 : vector<2x8x1xf32> to vector<2x8x16xf32>
    %225 = arith.mulf %220, %224 : vector<2x8x16xf32>
    %226 = arith.truncf %225 : vector<2x8x16xf32> to vector<2x8x16xbf16>
    "tpu.trace_start"() <{level = 10 : i32, message = "bqk,bkd->bqd"}> : () -> ()
    %cst_87 = arith.constant dense<0.000000e+00> : vector<2x8x32xf32>
    %227 = tpu.matmul %226, %214, %cst_87 {dimension_numbers = #tpu.dot_dimension_numbers<[2], [1], [1], [2], [0, 0, 0, 1, 1, 2], [0], [0]>} : vector<2x8x16xbf16>, vector<2x16x32xbf16>, vector<2x8x32xf32> -> vector<2x8x32xf32>
    "tpu.trace_stop"() : () -> ()
    %228 = arith.addf %177, %213 : vector<2x8x32xf32>
    %229 = arith.addf %228, %227 : vector<2x8x32xf32>
    %cst_88 = arith.constant 0.577350259 : f32
    %230 = vector.broadcast %cst_88 : f32 to vector<2x8x32xf32>
    %231 = arith.mulf %229, %230 : vector<2x8x32xf32>
    %232 = vector.shape_cast %231 : vector<2x8x32xf32> to vector<16x32xf32>
    %233 = arith.truncf %232 : vector<16x32xf32> to vector<16x32xbf16>
    %c0_89 = arith.constant 0 : index
    %c0_90 = arith.constant 0 : index
    %234 = vector.load %arg11[%c0_89, %c0_90] : memref<32x32xbf16, #tpu.memory_space<vmem>>, vector<32x32xbf16>
    %cst_91 = arith.constant dense<0.000000e+00> : vector<16x32xf32>
    %235 = tpu.matmul %233, %234, %cst_91 {dimension_numbers = #tpu.dot_dimension_numbers<[1], [0], [0], [1], [0, 0, 1, 1], [], []>} : vector<16x32xbf16>, vector<32x32xbf16>, vector<16x32xf32> -> vector<16x32xf32>
    %c0_92 = arith.constant 0 : index
    %c0_93 = arith.constant 0 : index
    %236 = vector.load %arg12[%c0_92, %c0_93] : memref<1x32xf32, #tpu.memory_space<vmem>>, vector<1x32xf32>
    %237 = vector.broadcast %236 : vector<1x32xf32> to vector<16x32xf32>
    %238 = arith.addf %235, %237 : vector<16x32xf32>
    %239 = vector.shape_cast %238 : vector<16x32xf32> to vector<2x8x32xf32>
    %cst_94 = arith.constant 0.000000e+00 : f32
    %240 = vector.broadcast %cst_94 : f32 to vector<2x8x64xf32>
    %241 = tpu.concatenate %239, %211, %225, %240 in 2 : vector<2x8x32xf32>, vector<2x8x16xf32>, vector<2x8x16xf32>, vector<2x8x64xf32> -> vector<2x8x128xf32>
    %c0_95 = arith.constant 0 : index
    %c0_96 = arith.constant 0 : index
    %c0_97 = arith.constant 0 : index
    %242 = vector.load %arg13[%c0_95, %c0_96, %c0_97] : memref<2x8x128xf32, #tpu.memory_space<vmem>>, vector<2x8x128xf32>
    tpu.vector_store %arg13[%c0_95, %c0_96, %c0_97], %241 {strides = array<i32>} : memref<2x8x128xf32, #tpu.memory_space<vmem>>, vector<2x8x128xf32>,
    return
  }
}

</mosaic_0001>

<llo_original>
// kernel: _convmodel_forward.1
$region0: #{_convmodel_forward.1}
  #allocation0 [shape = 'u32[]', space=smem, size = 0x4, offset = 0x4, fixed_abs, tag = 'smem constant byte address 0x4 - core index']
  #allocation1 [shape = 'u32[144,128]{1,0:T(1,128)}', space=vmem, size = 0x12000, scoped, tag = 'internal scratch']
  %s0 = inlined_call_operand.vmem [shape: s32[2], index: 0, kind: input, shape index: {}]
  %s1 = inlined_call_operand.vmem [shape: bf16[64,32], index: 1, kind: input, shape index: {}]
  %s2 = inlined_call_operand.vmem [shape: bf16[16,32], index: 2, kind: input, shape index: {}]
  %s3 = inlined_call_operand.vmem [shape: bf16[32,32], index: 3, kind: input, shape index: {}]
  %s4 = inlined_call_operand.vmem [shape: f32[1,32], index: 4, kind: input, shape index: {}]
  %s5 = inlined_call_operand.vmem [shape: bf16[3,32,64], index: 5, kind: input, shape index: {}]
  %s6 = inlined_call_operand.vmem [shape: f32[1,64], index: 6, kind: input, shape index: {}]
  %s7 = inlined_call_operand.vmem [shape: bf16[32,32], index: 7, kind: input, shape index: {}]
  %s8 = inlined_call_operand.vmem [shape: f32[1,32], index: 8, kind: input, shape index: {}]
  %s9 = inlined_call_operand.vmem [shape: bf16[3,32,64], index: 9, kind: input, shape index: {}]
  %s10 = inlined_call_operand.vmem [shape: f32[1,64], index: 10, kind: input, shape index: {}]
  %s11 = inlined_call_operand.vmem [shape: bf16[32,32], index: 11, kind: input, shape index: {}]
  %s12 = inlined_call_operand.vmem [shape: f32[1,32], index: 12, kind: input, shape index: {}]
  %s13 = inlined_call_operand.vmem [shape: f32[2,8,128], index: 13, kind: output, shape index: {}]
  %s14 = sld [smem:[#allocation0]]
  $region66: #{_convmodel_forward.1} parent=0
    _
  %s16 = ssub.s32 1, %s14
  %s17 = scalar_select 0, %s16, %s14
  $region1: #{_convmodel_forward.1} parent=0
    #allocation2 [shape = 'u8[512]{0}', space=smem, size = 0x200, scoped, tag = 'input window, operand 0, single buffered']
    #allocation3 [shape = 's32[1]{0}', space=sflag, size = 0x4, scoped, tag = 'scoped memory for _convmodel_forward.1']
    %18 = vsyncpa [#allocation3], 0
    // Predicated region
    $region2: #{_convmodel_forward.1} parent=1 // pred_check
      _
    $region3: #{_convmodel_forward.1} parent=1 // pred_check_branch
      %20 = sbr.rel (0) target = $region5
    $region4: #{_convmodel_forward.1} parent=1 // pred_region
      %s22 = ssub.s32 16, 16
      %23 = vsyncadd [#allocation3], %s22
      %s25 = sshll.u32 %s0, 4
      %s26 = int_to_ptr.vmem [resolvable:$true] %s25
      %28 = dma.vmem_to_smem %s26, 16, [#allocation2], [#allocation3]
    $region5: #{_convmodel_forward.1} parent=1 // pred_fallthru
      _
    // Predicated region
    $region6: #{_convmodel_forward.1} parent=1 // pred_check
      _
    $region7: #{_convmodel_forward.1} parent=1 // pred_check_branch
      %30 = sbr.rel (0) target = $region9
    $region8: #{_convmodel_forward.1} parent=1 // pred_region
      _
    $region9: #{_convmodel_forward.1} parent=1 // pred_fallthru
      _
    // Predicated region
    $region10: #{_convmodel_forward.1} parent=1 // pred_check
      _
    $region11: #{_convmodel_forward.1} parent=1 // pred_check_branch
      %32 = sbr.rel (0) target = $region13
    $region12: #{_convmodel_forward.1} parent=1 // pred_region
      _
    $region13: #{_convmodel_forward.1} parent=1 // pred_fallthru
      _
    // Predicated region
    $region14: #{_convmodel_forward.1} parent=1 // pred_check
      _
    $region15: #{_convmodel_forward.1} parent=1 // pred_check_branch
      %34 = sbr.rel (0) target = $region17
    $region16: #{_convmodel_forward.1} parent=1 // pred_region
      _
    $region17: #{_convmodel_forward.1} parent=1 // pred_fallthru
      _
    // Predicated region
    $region18: #{_convmodel_forward.1} parent=1 // pred_check
      _
    $region19: #{_convmodel_forward.1} parent=1 // pred_check_branch
      %36 = sbr.rel (0) target = $region21
    $region20: #{_convmodel_forward.1} parent=1 // pred_region
      _
    $region21: #{_convmodel_forward.1} parent=1 // pred_fallthru
      _
    // Predicated region
    $region22: #{_convmodel_forward.1} parent=1 // pred_check
      _
    $region23: #{_convmodel_forward.1} parent=1 // pred_check_branch
      %38 = sbr.rel (0) target = $region25
    $region24: #{_convmodel_forward.1} parent=1 // pred_region
      _
    $region25: #{_convmodel_forward.1} parent=1 // pred_fallthru
      _
    // Predicated region
    $region26: #{_convmodel_forward.1} parent=1 // pred_check
      _
    $region27: #{_convmodel_forward.1} parent=1 // pred_check_branch
      %40 = sbr.rel (0) target = $region29
    $region28: #{_convmodel_forward.1} parent=1 // pred_region
      _
    $region29: #{_convmodel_forward.1} parent=1 // pred_fallthru
      _
    // Predicated region
    $region30: #{_convmodel_forward.1} parent=1 // pred_check
      _
    $region31: #{_convmodel_forward.1} parent=1 // pred_check_branch
      %42 = sbr.rel (0) target = $region33
    $region32: #{_convmodel_forward.1} parent=1 // pred_region
      _
    $region33: #{_convmodel_forward.1} parent=1 // pred_fallthru
      _
    // Predicated region
    $region34: #{_convmodel_forward.1} parent=1 // pred_check
      _
    $region35: #{_convmodel_forward.1} parent=1 // pred_check_branch
      %44 = sbr.rel (0) target = $region37
    $region36: #{_convmodel_forward.1} parent=1 // pred_region
      _
    $region37: #{_convmodel_forward.1} parent=1 // pred_fallthru
      _
    // Predicated region
    $region38: #{_convmodel_forward.1} parent=1 // pred_check
      _
    $region39: #{_convmodel_forward.1} parent=1 // pred_check_branch
      %46 = sbr.rel (0) target = $region41
    $region40: #{_convmodel_forward.1} parent=1 // pred_region
      _
    $region41: #{_convmodel_forward.1} parent=1 // pred_fallthru
      _
    // Predicated region
    $region42: #{_convmodel_forward.1} parent=1 // pred_check
      _
    $region43: #{_convmodel_forward.1} parent=1 // pred_check_branch
      %48 = sbr.rel (0) target = $region45
    $region44: #{_convmodel_forward.1} parent=1 // pred_region
      _
    $region45: #{_convmodel_forward.1} parent=1 // pred_fallthru
      _
    // Predicated region
    $region46: #{_convmodel_forward.1} parent=1 // pred_check
      _
    $region47: #{_convmodel_forward.1} parent=1 // pred_check_branch
      %50 = sbr.rel (0) target = $region49
    $region48: #{_convmodel_forward.1} parent=1 // pred_region
      _
    $region49: #{_convmodel_forward.1} parent=1 // pred_fallthru
      _
    // Predicated region
    $region50: #{_convmodel_forward.1} parent=1 // pred_check
      _
    $region51: #{_convmodel_forward.1} parent=1 // pred_check_branch
      %52 = sbr.rel (0) target = $region53
    $region52: #{_convmodel_forward.1} parent=1 // pred_region
      _
    $region53: #{_convmodel_forward.1} parent=1 // pred_fallthru
      _
    // Predicated region
    $region54: #{_convmodel_forward.1} parent=1 // pred_check
      _
    $region55: #{_convmodel_forward.1} parent=1 // pred_check_branch
      %54 = sbr.rel (0) target = $region57
    $region56: #{_convmodel_forward.1} parent=1 // pred_region
      %55 = dma.done [#allocation3], 16
    $region57: #{_convmodel_forward.1} parent=1 // pred_fallthru
      _
    %56 = sfence
    %v58 = vld [vmem:[%s1] sm:$0xf]
    %v59 = vld [vmem:[%s1 + $0x4] sm:$0xf]
    %v60 = vld [vmem:[%s1 + $0x8] sm:$0xf]
    %v61 = vld [vmem:[%s1 + $0xc] sm:$0xf]
    %v62 = vld [vmem:[%s1 + $0x10] sm:$0xf]
    %v63 = vld [vmem:[%s1 + $0x14] sm:$0xf]
    %v64 = vld [vmem:[%s1 + $0x18] sm:$0xf]
    %v65 = vld [vmem:[%s1 + $0x1c] sm:$0xf]
    %v66 = vld [vmem:[%s3] sm:$0xf]
    %v67 = vld [vmem:[%s3 + $0x4] sm:$0xf]
    %v68 = vld [vmem:[%s3 + $0x8] sm:$0xf]
    %v69 = vld [vmem:[%s3 + $0xc] sm:$0xf]
    %v70 = vld [vmem:[%s4] sm:$0x1]
    %v72 = vlaneseq
    %v73 = vshrl.u32 %v72, 7
    %v74 = vsub.s32 0, %v73
    %v75 = vrot.slane %v70, %v74
    %v85 = vunpack.c.l.b16 %v58
    %v86 = vunpack.c.l.b16 %v59
    %v87 = vunpack.c.l.b16 %v60
    %v88 = vunpack.c.l.b16 %v61
    %v89 = vunpack.c.l.b16 %v62
    %v90 = vunpack.c.l.b16 %v63
    %v91 = vunpack.c.l.b16 %v64
    %v92 = vunpack.c.l.b16 %v65
    %v93 = vpack.c.b16 %v86, %v85
    %v94 = vpack.c.b16 %v88, %v87
    %v95 = vpack.c.b16 %v90, %v89
    %v96 = vpack.c.b16 %v92, %v91
    %v101 = vunpack.c.l.b16 %v66
    %v102 = vunpack.c.l.b16 %v67
    %v103 = vunpack.c.l.b16 %v68
    %v104 = vunpack.c.l.b16 %v69
    %v105 = vpack.c.b16 %v102, %v101
    %v106 = vpack.c.b16 %v104, %v103
    %vm109 = vcmask 261120
    %v111 = vsel %vm109, %v93, 0
    %v114 = vsel %vm109, %v94, 0
    %v117 = vsel %vm109, %v95, 0
    %v120 = vsel %vm109, %v96, 0
    %122 = vmatprep.subr.bf16.mxu0 0
    %123 = vmatpush1.bf16.msra.mxu0 %v105
    %124 = vmatprep.subr.bf16.mxu0 0
    %125 = vmatpush1.bf16.msra.mxu0 %v106
    %126 = vmatprep.subr.bf16.mxu0 0
    %127 = vmatpush1.bf16.msra.mxu0 0
    %128 = vmatprep.subr.bf16.mxu0 0
    %129 = vmatpush1.bf16.msra.mxu0 0
    %130 = vmatprep.subr.bf16.mxu0 0
    %131 = vmatpush1.bf16.msra.mxu0 0
    %132 = vmatprep.subr.bf16.mxu0 0
    %133 = vmatpush1.bf16.msra.mxu0 0
    %134 = vmatprep.subr.bf16.mxu0 0
    %135 = vmatpush1.bf16.msra.mxu0 0
    %136 = vmatprep.subr.bf16.mxu0 0
    %137 = vmatpush1.bf16.msra.mxu0 0
    %138 = vmatprep.subr.bf16.mxu0 0
    %139 = vmatpush1.bf16.msra.mxu0 0
    %140 = vmatprep.subr.bf16.mxu0 0
    %141 = vmatpush1.bf16.msra.mxu0 0
    %142 = vmatprep.subr.bf16.mxu0 0
    %143 = vmatpush1.bf16.msra.mxu0 0
    %144 = vmatprep.subr.bf16.mxu0 0
    %145 = vmatpush1.bf16.msra.mxu0 0
    %146 = vmatprep.subr.bf16.mxu0 0
    %147 = vmatpush1.bf16.msra.mxu0 0
    %148 = vmatprep.subr.bf16.mxu0 0
    %149 = vmatpush1.bf16.msra.mxu0 0
    %150 = vmatprep.subr.bf16.mxu0 0
    %151 = vmatpush1.bf16.msra.mxu0 0
    %152 = vmatprep.subr.bf16.mxu0 0
    %153 = vmatpush1.bf16.msra.mxu0 0
    %154 = vmatprep.mubr.bf16.mxu0 0
    %155 = vmatmul.mubr.bf16.gmra.mrb[0].mxu0 %v111
    %v156 = vpop.f32.mrb[0].mxu0
    %v157 = vadd.f32 %v75, %v156
    %v158 = vpop.f32.mrb[0].mxu0
    %v159 = vpop.f32.mrb[0].mxu0
    %v160 = vadd.f32 %v75, %v159
    %v161 = vpop.f32.mrb[0].mxu0
    %162 = vmatprep.mubr.bf16.mxu0 0
    %163 = vmatmul.mubr.bf16.gmra.mrb[0].mxu0 %v114
    %v164 = vpop.f32.mrb[0].mxu0
    %v165 = vadd.f32 %v75, %v164
    %v166 = vpop.f32.mrb[0].mxu0
    %v167 = vpop.f32.mrb[0].mxu0
    %v168 = vadd.f32 %v75, %v167
    %v169 = vpop.f32.mrb[0].mxu0
    %170 = vmatprep.mubr.bf16.mxu0 0
    %171 = vmatmul.mubr.bf16.gmra.mrb[0].mxu0 %v117
    %v172 = vpop.f32.mrb[0].mxu0
    %v173 = vadd.f32 %v75, %v172
    %v174 = vpop.f32.mrb[0].mxu0
    %v175 = vpop.f32.mrb[0].mxu0
    %v176 = vadd.f32 %v75, %v175
    %v177 = vpop.f32.mrb[0].mxu0
    %178 = vmatprep.mubr.bf16.mxu0 0
    %179 = vmatmul.mubr.bf16.gmra.mrb[0].mxu0 %v120
    %v180 = vpop.f32.mrb[0].mxu0
    %v181 = vadd.f32 %v75, %v180
    %v182 = vpop.f32.mrb[0].mxu0
    %v183 = vpop.f32.mrb[0].mxu0
    %v184 = vadd.f32 %v75, %v183
    %v185 = vpop.f32.mrb[0].mxu0
    %186 = vdwg.mxu0
    %v187 = vlaneseq
    %v188 = vshrl.u32 %v187, 7
    %v189 = vadd.s32 %v188, 8
    %v190 = vadd.s32 %v188, 16
    %v191 = vadd.s32 %v188, 24
    %v192 = vadd.s32 %v188, 32
    %v193 = vadd.s32 %v188, 40
    %v194 = vadd.s32 %v188, 48
    %v195 = vadd.s32 %v188, 56
    %vm196 = vcmp.lt.s32.totalorder %v188, 0
    %v197 = vsub.s32 0, %v188
    %v198 = vsel %vm196, %v197, %v188
    %v199 = vshrl.u32 %v198, 4
    %v200 = vand.u32 %v198, 15
    %v201 = vsub.s32 0, %v200
    %v202 = vsel %vm196, %v201, %v200
    %vm203 = vcmp.lt.s32.totalorder %v189, 0
    %v204 = vsub.s32 0, %v189
    %v205 = vsel %vm203, %v204, %v189
    %v206 = vshrl.u32 %v205, 4
    %v207 = vand.u32 %v205, 15
    %v208 = vsub.s32 0, %v207
    %v209 = vsel %vm203, %v208, %v207
    %vm210 = vcmp.lt.s32.totalorder %v190, 0
    %v211 = vsub.s32 0, %v190
    %v212 = vsel %vm210, %v211, %v190
    %v213 = vshrl.u32 %v212, 4
    %v214 = vand.u32 %v212, 15
    %v215 = vsub.s32 0, %v214
    %v216 = vsel %vm210, %v215, %v214
    %vm217 = vcmp.lt.s32.totalorder %v191, 0
    %v218 = vsub.s32 0, %v191
    %v219 = vsel %vm217, %v218, %v191
    %v220 = vshrl.u32 %v219, 4
    %v221 = vand.u32 %v219, 15
    %v222 = vsub.s32 0, %v221
    %v223 = vsel %vm217, %v222, %v221
    %vm224 = vcmp.lt.s32.totalorder %v192, 0
    %v225 = vsub.s32 0, %v192
    %v226 = vsel %vm224, %v225, %v192
    %v227 = vshrl.u32 %v226, 4
    %v228 = vand.u32 %v226, 15
    %v229 = vsub.s32 0, %v228
    %v230 = vsel %vm224, %v229, %v228
    %vm231 = vcmp.lt.s32.totalorder %v193, 0
    %v232 = vsub.s32 0, %v193
    %v233 = vsel %vm231, %v232, %v193
    %v234 = vshrl.u32 %v233, 4
    %v235 = vand.u32 %v233, 15
    %v236 = vsub.s32 0, %v235
    %v237 = vsel %vm231, %v236, %v235
    %vm238 = vcmp.lt.s32.totalorder %v194, 0
    %v239 = vsub.s32 0, %v194
    %v240 = vsel %vm238, %v239, %v194
    %v241 = vshrl.u32 %v240, 4
    %v242 = vand.u32 %v240, 15
    %v243 = vsub.s32 0, %v242
    %v244 = vsel %vm238, %v243, %v242
    %vm245 = vcmp.lt.s32.totalorder %v195, 0
    %v246 = vsub.s32 0, %v195
    %v247 = vsel %vm245, %v246, %v195
    %v248 = vshrl.u32 %v247, 4
    %v249 = vand.u32 %v247, 15
    %v250 = vsub.s32 0, %v249
    %v251 = vsel %vm245, %v250, %v249
    %vm252 = vcmp.ne.s32.totalorder %v202, 0
    %vm253 = vcmp.ne.s32.totalorder %v209, 0
    %vm254 = vcmp.ne.s32.totalorder %v216, 0
    %vm255 = vcmp.ne.s32.totalorder %v223, 0
    %vm256 = vcmp.ne.s32.totalorder %v230, 0
    %vm257 = vcmp.ne.s32.totalorder %v237, 0
    %vm258 = vcmp.ne.s32.totalorder %v244, 0
    %vm259 = vcmp.ne.s32.totalorder %v251, 0
    %vm260 = vcmp.lt.s32.totalorder %v202, 0
    %vm261 = vcmp.lt.s32.totalorder %v209, 0
    %vm262 = vcmp.lt.s32.totalorder %v216, 0
    %vm263 = vcmp.lt.s32.totalorder %v223, 0
    %vm264 = vcmp.lt.s32.totalorder %v230, 0
    %vm265 = vcmp.lt.s32.totalorder %v237, 0
    %vm266 = vcmp.lt.s32.totalorder %v244, 0
    %vm267 = vcmp.lt.s32.totalorder %v251, 0
    %vm268 = vmand %vm260, %vm252
    %vm269 = vmand %vm261, %vm253
    %vm270 = vmand %vm262, %vm254
    %vm271 = vmand %vm263, %vm255
    %vm272 = vmand %vm264, %vm256
    %vm273 = vmand %vm265, %vm257
    %vm274 = vmand %vm266, %vm258
    %vm275 = vmand %vm267, %vm259
    %v276 = vadd.s32 %v202, 16
    %v277 = vadd.s32 %v209, 16
    %v278 = vadd.s32 %v216, 16
    %v279 = vadd.s32 %v223, 16
    %v280 = vadd.s32 %v230, 16
    %v281 = vadd.s32 %v237, 16
    %v282 = vadd.s32 %v244, 16
    %v283 = vadd.s32 %v251, 16
    %v284 = vsel %vm268, %v276, %v202
    %v285 = vsel %vm269, %v277, %v209
    %v286 = vsel %vm270, %v278, %v216
    %v287 = vsel %vm271, %v279, %v223
    %v288 = vsel %vm272, %v280, %v230
    %v289 = vsel %vm273, %v281, %v237
    %v290 = vsel %vm274, %v282, %v244
    %v291 = vsel %vm275, %v283, %v251
    %v292 = vld [vmem:[%s6] sm:$0x1]
    %v294 = vlaneseq
    %v295 = vshrl.u32 %v294, 7
    %v296 = vsub.s32 0, %v295
    %v297 = vrot.slane %v292, %v296
    %v299 = vadd.f32 %v297, 0.0
    %vm308 = vcmask 1040384
    %v309 = vrot.slane %v157, 7
    %v310 = vrot.slane %v160, 7
    %v311 = vsel %vm308, %v309, %v310
    %v312 = vrot.slane %v165, 7
    %v313 = vsel %vm308, %v310, %v312
    %v314 = vrot.slane %v168, 7
    %v315 = vsel %vm308, %v312, %v314
    %v316 = vrot.slane %v173, 7
    %v317 = vsel %vm308, %v314, %v316
    %v318 = vrot.slane %v176, 7
    %v319 = vsel %vm308, %v316, %v318
    %v320 = vrot.slane %v181, 7
    %v321 = vsel %vm308, %v318, %v320
    %v322 = vrot.slane %v184, 7
    %v323 = vsel %vm308, %v320, %v322
    %v332 = vsel %vm308, 0.0, %v309
    %v333 = vadd.s32 %v284, 4294967295
    %v334 = vadd.s32 %v285, 4294967295
    %v335 = vadd.s32 %v286, 4294967295
    %v336 = vadd.s32 %v287, 4294967295
    %v337 = vadd.s32 %v288, 4294967295
    %v338 = vadd.s32 %v289, 4294967295
    %v339 = vadd.s32 %v290, 4294967295
    %v340 = vadd.s32 %v291, 4294967295
    %vm341 = vcmp.ge.s32.totalorder %v333, 0
    %vm342 = vcmp.ge.s32.totalorder %v334, 0
    %vm343 = vcmp.ge.s32.totalorder %v335, 0
    %vm344 = vcmp.ge.s32.totalorder %v336, 0
    %vm345 = vcmp.ge.s32.totalorder %v337, 0
    %vm346 = vcmp.ge.s32.totalorder %v338, 0
    %vm347 = vcmp.ge.s32.totalorder %v339, 0
    %vm348 = vcmp.ge.s32.totalorder %v340, 0
    %vm349 = vcmp.lt.s32.totalorder %v333, 16
    %vm350 = vcmp.lt.s32.totalorder %v334, 16
    %vm351 = vcmp.lt.s32.totalorder %v335, 16
    %vm352 = vcmp.lt.s32.totalorder %v336, 16
    %vm353 = vcmp.lt.s32.totalorder %v337, 16
    %vm354 = vcmp.lt.s32.totalorder %v338, 16
    %vm355 = vcmp.lt.s32.totalorder %v339, 16
    %vm356 = vcmp.lt.s32.totalorder %v340, 16
    %vm357 = vmand %vm341, %vm349
    %vm358 = vmand %vm342, %vm350
    %vm359 = vmand %vm343, %vm351
    %vm360 = vmand %vm344, %vm352
    %vm361 = vmand %vm345, %vm353
    %vm362 = vmand %vm346, %vm354
    %vm363 = vmand %vm347, %vm355
    %vm364 = vmand %vm348, %vm356
    %v365 = vsel %vm357, 1, 0
    %v366 = vsel %vm358, 1, 0
    %v367 = vsel %vm359, 1, 0
    %v368 = vsel %vm360, 1, 0
    %v369 = vsel %vm361, 1, 0
    %v370 = vsel %vm362, 1, 0
    %v371 = vsel %vm363, 1, 0
    %v372 = vsel %vm364, 1, 0
    %vm373 = vcmp.eq.s32.totalorder %v365, 1
    %vm374 = vcmp.eq.s32.totalorder %v366, 1
    %vm375 = vcmp.eq.s32.totalorder %v367, 1
    %vm376 = vcmp.eq.s32.totalorder %v368, 1
    %vm377 = vcmp.eq.s32.totalorder %v369, 1
    %vm378 = vcmp.eq.s32.totalorder %v370, 1
    %vm379 = vcmp.eq.s32.totalorder %v371, 1
    %vm380 = vcmp.eq.s32.totalorder %v372, 1
    %v381 = vsel %vm373, %v332, 0.0
    %v382 = vsel %vm374, %v311, 0.0
    %v383 = vsel %vm375, %v313, 0.0
    %v384 = vsel %vm376, %v315, 0.0
    %v385 = vsel %vm377, %v317, 0.0
    %v386 = vsel %vm378, %v319, 0.0
    %v387 = vsel %vm379, %v321, 0.0
    %v388 = vsel %vm380, %v323, 0.0
    %v389 = vpack.c.bf16 %v382, %v381
    %v390 = vpack.c.bf16 %v384, %v383
    %v391 = vpack.c.bf16 %v386, %v385
    %v392 = vpack.c.bf16 %v388, %v387
    %v393 = vld [vmem:[%s5] sm:$0xf]
    %v394 = vld [vmem:[%s5 + $0x4] sm:$0xf]
    %v395 = vld [vmem:[%s5 + $0x8] sm:$0xf]
    %v396 = vld [vmem:[%s5 + $0xc] sm:$0xf]
    %v401 = vunpack.c.l.b16 %v393
    %v402 = vunpack.c.l.b16 %v394
    %v403 = vunpack.c.l.b16 %v395
    %v404 = vunpack.c.l.b16 %v396
    %v405 = vpack.c.b16 %v402, %v401
    %v406 = vpack.c.b16 %v404, %v403
    %v410 = vsel %vm109, %v389, 0
    %v413 = vsel %vm109, %v390, 0
    %v416 = vsel %vm109, %v391, 0
    %v419 = vsel %vm109, %v392, 0
    %421 = vmatprep.subr.bf16.mxu0 0
    %422 = vmatpush1.bf16.msra.mxu0 %v405
    %423 = vmatprep.subr.bf16.mxu0 0
    %424 = vmatpush1.bf16.msra.mxu0 %v406
    %425 = vmatprep.subr.bf16.mxu0 0
    %426 = vmatpush1.bf16.msra.mxu0 0
    %427 = vmatprep.subr.bf16.mxu0 0
    %428 = vmatpush1.bf16.msra.mxu0 0
    %429 = vmatprep.subr.bf16.mxu0 0
    %430 = vmatpush1.bf16.msra.mxu0 0
    %431 = vmatprep.subr.bf16.mxu0 0
    %432 = vmatpush1.bf16.msra.mxu0 0
    %433 = vmatprep.subr.bf16.mxu0 0
    %434 = vmatpush1.bf16.msra.mxu0 0
    %435 = vmatprep.subr.bf16.mxu0 0
    %436 = vmatpush1.bf16.msra.mxu0 0
    %437 = vmatprep.subr.bf16.mxu0 0
    %438 = vmatpush1.bf16.msra.mxu0 0
    %439 = vmatprep.subr.bf16.mxu0 0
    %440 = vmatpush1.bf16.msra.mxu0 0
    %441 = vmatprep.subr.bf16.mxu0 0
    %442 = vmatpush1.bf16.msra.mxu0 0
    %443 = vmatprep.subr.bf16.mxu0 0
    %444 = vmatpush1.bf16.msra.mxu0 0
    %445 = vmatprep.subr.bf16.mxu0 0
    %446 = vmatpush1.bf16.msra.mxu0 0
    %447 = vmatprep.subr.bf16.mxu0 0
    %448 = vmatpush1.bf16.msra.mxu0 0
    %449 = vmatprep.subr.bf16.mxu0 0
    %450 = vmatpush1.bf16.msra.mxu0 0
    %451 = vmatprep.subr.bf16.mxu0 0
    %452 = vmatpush1.bf16.msra.mxu0 0
    %453 = vmatprep.mubr.bf16.mxu0 0
    %454 = vmatmul.mubr.bf16.gmra.mrb[0].mxu0 %v410
    %v455 = vpop.f32.mrb[0].mxu0
    %v456 = vadd.f32 0.0, %v455
    %v457 = vpop.f32.mrb[0].mxu0
    %v458 = vpop.f32.mrb[0].mxu0
    %v459 = vadd.f32 0.0, %v458
    %v460 = vpop.f32.mrb[0].mxu0
    %461 = vmatprep.mubr.bf16.mxu0 0
    %462 = vmatmul.mubr.bf16.gmra.mrb[0].mxu0 %v413
    %v463 = vpop.f32.mrb[0].mxu0
    %v464 = vadd.f32 0.0, %v463
    %v465 = vpop.f32.mrb[0].mxu0
    %v466 = vpop.f32.mrb[0].mxu0
    %v467 = vadd.f32 0.0, %v466
    %v468 = vpop.f32.mrb[0].mxu0
    %469 = vmatprep.mubr.bf16.mxu0 0
    %470 = vmatmul.mubr.bf16.gmra.mrb[0].mxu0 %v416
    %v471 = vpop.f32.mrb[0].mxu0
    %v472 = vadd.f32 0.0, %v471
    %v473 = vpop.f32.mrb[0].mxu0
    %v474 = vpop.f32.mrb[0].mxu0
    %v475 = vadd.f32 0.0, %v474
    %v476 = vpop.f32.mrb[0].mxu0
    %477 = vmatprep.mubr.bf16.mxu0 0
    %478 = vmatmul.mubr.bf16.gmra.mrb[0].mxu0 %v419
    %v479 = vpop.f32.mrb[0].mxu0
    %v480 = vadd.f32 0.0, %v479
    %v481 = vpop.f32.mrb[0].mxu0
    %v482 = vpop.f32.mrb[0].mxu0
    %v483 = vadd.f32 0.0, %v482
    %v484 = vpop.f32.mrb[0].mxu0
    %485 = vdwg.mxu0
    %v486 = vadd.f32 %v299, %v456
    %v487 = vadd.f32 %v299, %v459
    %v488 = vadd.f32 %v299, %v464
    %v489 = vadd.f32 %v299, %v467
    %v490 = vadd.f32 %v299, %v472
    %v491 = vadd.f32 %v299, %v475
    %v492 = vadd.f32 %v299, %v480
    %v493 = vadd.f32 %v299, %v483
    %v494 = vpack.c.bf16 %v160, %v157
    %v495 = vpack.c.bf16 %v168, %v165
    %v496 = vpack.c.bf16 %v176, %v173
    %v497 = vpack.c.bf16 %v184, %v181
    %s498 = scalar_lea.vmem %s5, 16
    %v499 = vld [vmem:[%s498] sm:$0xf]
    %v500 = vld [vmem:[%s498 + $0x4] sm:$0xf]
    %v501 = vld [vmem:[%s498 + $0x8] sm:$0xf]
    %v502 = vld [vmem:[%s498 + $0xc] sm:$0xf]
    %v507 = vunpack.c.l.b16 %v499
    %v508 = vunpack.c.l.b16 %v500
    %v509 = vunpack.c.l.b16 %v501
    %v510 = vunpack.c.l.b16 %v502
    %v511 = vpack.c.b16 %v508, %v507
    %v512 = vpack.c.b16 %v510, %v509
    %v516 = vsel %vm109, %v494, 0
    %v519 = vsel %vm109, %v495, 0
    %v522 = vsel %vm109, %v496, 0
    %v525 = vsel %vm109, %v497, 0
    %527 = vmatprep.subr.bf16.mxu0 0
    %528 = vmatpush1.bf16.msra.mxu0 %v511
    %529 = vmatprep.subr.bf16.mxu0 0
    %530 = vmatpush1.bf16.msra.mxu0 %v512
    %531 = vmatprep.subr.bf16.mxu0 0
    %532 = vmatpush1.bf16.msra.mxu0 0
    %533 = vmatprep.subr.bf16.mxu0 0
    %534 = vmatpush1.bf16.msra.mxu0 0
    %535 = vmatprep.subr.bf16.mxu0 0
    %536 = vmatpush1.bf16.msra.mxu0 0
    %537 = vmatprep.subr.bf16.mxu0 0
    %538 = vmatpush1.bf16.msra.mxu0 0
    %539 = vmatprep.subr.bf16.mxu0 0
    %540 = vmatpush1.bf16.msra.mxu0 0
    %541 = vmatprep.subr.bf16.mxu0 0
    %542 = vmatpush1.bf16.msra.mxu0 0
    %543 = vmatprep.subr.bf16.mxu0 0
    %544 = vmatpush1.bf16.msra.mxu0 0
    %545 = vmatprep.subr.bf16.mxu0 0
    %546 = vmatpush1.bf16.msra.mxu0 0
    %547 = vmatprep.subr.bf16.mxu0 0
    %548 = vmatpush1.bf16.msra.mxu0 0
    %549 = vmatprep.subr.bf16.mxu0 0
    %550 = vmatpush1.bf16.msra.mxu0 0
    %551 = vmatprep.subr.bf16.mxu0 0
    %552 = vmatpush1.bf16.msra.mxu0 0
    %553 = vmatprep.subr.bf16.mxu0 0
    %554 = vmatpush1.bf16.msra.mxu0 0
    %555 = vmatprep.subr.bf16.mxu0 0
    %556 = vmatpush1.bf16.msra.mxu0 0
    %557 = vmatprep.subr.bf16.mxu0 0
    %558 = vmatpush1.bf16.msra.mxu0 0
    %559 = vmatprep.mubr.bf16.mxu0 0
    %560 = vmatmul.mubr.bf16.gmra.mrb[0].mxu0 %v516
    %v561 = vpop.f32.mrb[0].mxu0
    %v562 = vadd.f32 0.0, %v561
    %v563 = vpop.f32.mrb[0].mxu0
    %v564 = vpop.f32.mrb[0].mxu0
    %v565 = vadd.f32 0.0, %v564
    %v566 = vpop.f32.mrb[0].mxu0
    %567 = vmatprep.mubr.bf16.mxu0 0
    %568 = vmatmul.mubr.bf16.gmra.mrb[0].mxu0 %v519
    %v569 = vpop.f32.mrb[0].mxu0
    %v570 = vadd.f32 0.0, %v569
    %v571 = vpop.f32.mrb[0].mxu0
    %v572 = vpop.f32.mrb[0].mxu0
    %v573 = vadd.f32 0.0, %v572
    %v574 = vpop.f32.mrb[0].mxu0
    %575 = vmatprep.mubr.bf16.mxu0 0
    %576 = vmatmul.mubr.bf16.gmra.mrb[0].mxu0 %v522
    %v577 = vpop.f32.mrb[0].mxu0
    %v578 = vadd.f32 0.0, %v577
    %v579 = vpop.f32.mrb[0].mxu0
    %v580 = vpop.f32.mrb[0].mxu0
    %v581 = vadd.f32 0.0, %v580
    %v582 = vpop.f32.mrb[0].mxu0
    %583 = vmatprep.mubr.bf16.mxu0 0
    %584 = vmatmul.mubr.bf16.gmra.mrb[0].mxu0 %v525
    %v585 = vpop.f32.mrb[0].mxu0
    %v586 = vadd.f32 0.0, %v585
    %v587 = vpop.f32.mrb[0].mxu0
    %v588 = vpop.f32.mrb[0].mxu0
    %v589 = vadd.f32 0.0, %v588
    %v590 = vpop.f32.mrb[0].mxu0
    %591 = vdwg.mxu0
    %v592 = vadd.f32 %v486, %v562
    %v593 = vadd.f32 %v487, %v565
    %v594 = vadd.f32 %v488, %v570
    %v595 = vadd.f32 %v489, %v573
    %v596 = vadd.f32 %v490, %v578
    %v597 = vadd.f32 %v491, %v581
    %v598 = vadd.f32 %v492, %v586
    %v599 = vadd.f32 %v493, %v589
    %vm600 = vcmask 1046528
    %v601 = vrot.slane %v157, 1
    %v602 = vrot.slane %v160, 1
    %v603 = vsel %vm600, %v601, %v602
    %v604 = vrot.slane %v165, 1
    %v605 = vsel %vm600, %v602, %v604
    %v606 = vrot.slane %v168, 1
    %v607 = vsel %vm600, %v604, %v606
    %v608 = vrot.slane %v173, 1
    %v609 = vsel %vm600, %v606, %v608
    %v610 = vrot.slane %v176, 1
    %v611 = vsel %vm600, %v608, %v610
    %v612 = vrot.slane %v181, 1
    %v613 = vsel %vm600, %v610, %v612
    %v614 = vrot.slane %v184, 1
    %v615 = vsel %vm600, %v612, %v614
    %v624 = vsel %vm600, %v614, 0.0
    %v625 = vadd.s32 %v284, 1
    %v626 = vadd.s32 %v285, 1
    %v627 = vadd.s32 %v286, 1
    %v628 = vadd.s32 %v287, 1
    %v629 = vadd.s32 %v288, 1
    %v630 = vadd.s32 %v289, 1
    %v631 = vadd.s32 %v290, 1
    %v632 = vadd.s32 %v291, 1
    %vm633 = vcmp.ge.s32.totalorder %v625, 0
    %vm634 = vcmp.ge.s32.totalorder %v626, 0
    %vm635 = vcmp.ge.s32.totalorder %v627, 0
    %vm636 = vcmp.ge.s32.totalorder %v628, 0
    %vm637 = vcmp.ge.s32.totalorder %v629, 0
    %vm638 = vcmp.ge.s32.totalorder %v630, 0
    %vm639 = vcmp.ge.s32.totalorder %v631, 0
    %vm640 = vcmp.ge.s32.totalorder %v632, 0
    %vm641 = vcmp.lt.s32.totalorder %v625, 16
    %vm642 = vcmp.lt.s32.totalorder %v626, 16
    %vm643 = vcmp.lt.s32.totalorder %v627, 16
    %vm644 = vcmp.lt.s32.totalorder %v628, 16
    %vm645 = vcmp.lt.s32.totalorder %v629, 16
    %vm646 = vcmp.lt.s32.totalorder %v630, 16
    %vm647 = vcmp.lt.s32.totalorder %v631, 16
    %vm648 = vcmp.lt.s32.totalorder %v632, 16
    %vm649 = vmand %vm633, %vm641
    %vm650 = vmand %vm634, %vm642
    %vm651 = vmand %vm635, %vm643
    %vm652 = vmand %vm636, %vm644
    %vm653 = vmand %vm637, %vm645
    %vm654 = vmand %vm638, %vm646
    %vm655 = vmand %vm639, %vm647
    %vm656 = vmand %vm640, %vm648
    %v657 = vsel %vm649, 1, 0
    %v658 = vsel %vm650, 1, 0
    %v659 = vsel %vm651, 1, 0
    %v660 = vsel %vm652, 1, 0
    %v661 = vsel %vm653, 1, 0
    %v662 = vsel %vm654, 1, 0
    %v663 = vsel %vm655, 1, 0
    %v664 = vsel %vm656, 1, 0
    %vm665 = vcmp.eq.s32.totalorder %v657, 1
    %vm666 = vcmp.eq.s32.totalorder %v658, 1
    %vm667 = vcmp.eq.s32.totalorder %v659, 1
    %vm668 = vcmp.eq.s32.totalorder %v660, 1
    %vm669 = vcmp.eq.s32.totalorder %v661, 1
    %vm670 = vcmp.eq.s32.totalorder %v662, 1
    %vm671 = vcmp.eq.s32.totalorder %v663, 1
    %vm672 = vcmp.eq.s32.totalorder %v664, 1
    %v673 = vsel %vm665, %v603, 0.0
    %v674 = vsel %vm666, %v605, 0.0
    %v675 = vsel %vm667, %v607, 0.0
    %v676 = vsel %vm668, %v609, 0.0
    %v677 = vsel %vm669, %v611, 0.0
    %v678 = vsel %vm670, %v613, 0.0
    %v679 = vsel %vm671, %v615, 0.0
    %v680 = vsel %vm672, %v624, 0.0
    %v681 = vpack.c.bf16 %v674, %v673
    %v682 = vpack.c.bf16 %v676, %v675
    %v683 = vpack.c.bf16 %v678, %v677
    %v684 = vpack.c.bf16 %v680, %v679
    %s685 = scalar_lea.vmem %s5, 32
    %v686 = vld [vmem:[%s685] sm:$0xf]
    %v687 = vld [vmem:[%s685 + $0x4] sm:$0xf]
    %v688 = vld [vmem:[%s685 + $0x8] sm:$0xf]
    %v689 = vld [vmem:[%s685 + $0xc] sm:$0xf]
    %v694 = vunpack.c.l.b16 %v686
    %v695 = vunpack.c.l.b16 %v687
    %v696 = vunpack.c.l.b16 %v688
    %v697 = vunpack.c.l.b16 %v689
    %v698 = vpack.c.b16 %v695, %v694
    %v699 = vpack.c.b16 %v697, %v696
    %v703 = vsel %vm109, %v681, 0
    %v706 = vsel %vm109, %v682, 0
    %v709 = vsel %vm109, %v683, 0
    %v712 = vsel %vm109, %v684, 0
    %714 = vmatprep.subr.bf16.mxu0 0
    %715 = vmatpush1.bf16.msra.mxu0 %v698
    %716 = vmatprep.subr.bf16.mxu0 0
    %717 = vmatpush1.bf16.msra.mxu0 %v699
    %718 = vmatprep.subr.bf16.mxu0 0
    %719 = vmatpush1.bf16.msra.mxu0 0
    %720 = vmatprep.subr.bf16.mxu0 0
    %721 = vmatpush1.bf16.msra.mxu0 0
    %722 = vmatprep.subr.bf16.mxu0 0
    %723 = vmatpush1.bf16.msra.mxu0 0
    %724 = vmatprep.subr.bf16.mxu0 0
    %725 = vmatpush1.bf16.msra.mxu0 0
    %726 = vmatprep.subr.bf16.mxu0 0
    %727 = vmatpush1.bf16.msra.mxu0 0
    %728 = vmatprep.subr.bf16.mxu0 0
    %729 = vmatpush1.bf16.msra.mxu0 0
    %730 = vmatprep.subr.bf16.mxu0 0
    %731 = vmatpush1.bf16.msra.mxu0 0
    %732 = vmatprep.subr.bf16.mxu0 0
    %733 = vmatpush1.bf16.msra.mxu0 0
    %734 = vmatprep.subr.bf16.mxu0 0
    %735 = vmatpush1.bf16.msra.mxu0 0
    %736 = vmatprep.subr.bf16.mxu0 0
    %737 = vmatpush1.bf16.msra.mxu0 0
    %738 = vmatprep.subr.bf16.mxu0 0
    %739 = vmatpush1.bf16.msra.mxu0 0
    %740 = vmatprep.subr.bf16.mxu0 0
    %741 = vmatpush1.bf16.msra.mxu0 0
    %742 = vmatprep.subr.bf16.mxu0 0
    %743 = vmatpush1.bf16.msra.mxu0 0
    %744 = vmatprep.subr.bf16.mxu0 0
    %745 = vmatpush1.bf16.msra.mxu0 0
    %746 = vmatprep.mubr.bf16.mxu0 0
    %747 = vmatmul.mubr.bf16.gmra.mrb[0].mxu0 %v703
    %v748 = vpop.f32.mrb[0].mxu0
    %v749 = vadd.f32 0.0, %v748
    %v750 = vpop.f32.mrb[0].mxu0
    %v751 = vpop.f32.mrb[0].mxu0
    %v752 = vadd.f32 0.0, %v751
    %v753 = vpop.f32.mrb[0].mxu0
    %754 = vmatprep.mubr.bf16.mxu0 0
    %755 = vmatmul.mubr.bf16.gmra.mrb[0].mxu0 %v706
    %v756 = vpop.f32.mrb[0].mxu0
    %v757 = vadd.f32 0.0, %v756
    %v758 = vpop.f32.mrb[0].mxu0
    %v759 = vpop.f32.mrb[0].mxu0
    %v760 = vadd.f32 0.0, %v759
    %v761 = vpop.f32.mrb[0].mxu0
    %762 = vmatprep.mubr.bf16.mxu0 0
    %763 = vmatmul.mubr.bf16.gmra.mrb[0].mxu0 %v709
    %v764 = vpop.f32.mrb[0].mxu0
    %v765 = vadd.f32 0.0, %v764
    %v766 = vpop.f32.mrb[0].mxu0
    %v767 = vpop.f32.mrb[0].mxu0
    %v768 = vadd.f32 0.0, %v767
    %v769 = vpop.f32.mrb[0].mxu0
    %770 = vmatprep.mubr.bf16.mxu0 0
    %771 = vmatmul.mubr.bf16.gmra.mrb[0].mxu0 %v712
    %v772 = vpop.f32.mrb[0].mxu0
    %v773 = vadd.f32 0.0, %v772
    %v774 = vpop.f32.mrb[0].mxu0
    %v775 = vpop.f32.mrb[0].mxu0
    %v776 = vadd.f32 0.0, %v775
    %v777 = vpop.f32.mrb[0].mxu0
    %778 = vdwg.mxu0
    %v779 = vadd.f32 %v592, %v749
    %v780 = vadd.f32 %v593, %v752
    %v781 = vadd.f32 %v594, %v757
    %v782 = vadd.f32 %v595, %v760
    %v783 = vadd.f32 %v596, %v765
    %v784 = vadd.f32 %v597, %v768
    %v785 = vadd.f32 %v598, %v773
    %v786 = vadd.f32 %v599, %v776
    %v787 = vxor.u32 %v779, 2147483648
    %v788 = vxor.u32 %v780, 2147483648
    %v789 = vxor.u32 %v781, 2147483648
    %v790 = vxor.u32 %v782, 2147483648
    %v791 = vxor.u32 %v783, 2147483648
    %v792 = vxor.u32 %v784, 2147483648
    %v793 = vxor.u32 %v785, 2147483648
    %v794 = vxor.u32 %v786, 2147483648
    %v795 = vmul.f32 %v787, 1.442695
    %v796 = vpow.pop %v795
    %v797 = vmul.f32 %v788, 1.442695
    %v798 = vpow.pop %v797
    %v799 = vmul.f32 %v789, 1.442695
    %v800 = vpow.pop %v799
    %v801 = vmul.f32 %v790, 1.442695
    %v802 = vpow.pop %v801
    %v803 = vmul.f32 %v791, 1.442695
    %v804 = vpow.pop %v803
    %v805 = vmul.f32 %v792, 1.442695
    %v806 = vpow.pop %v805
    %v807 = vmul.f32 %v793, 1.442695
    %v808 = vpow.pop %v807
    %v809 = vmul.f32 %v794, 1.442695
    %v810 = vpow.pop %v809
    %v811 = vadd.f32 %v796, 1.0
    %v812 = vadd.f32 %v798, 1.0
    %v813 = vadd.f32 %v800, 1.0
    %v814 = vadd.f32 %v802, 1.0
    %v815 = vadd.f32 %v804, 1.0
    %v816 = vadd.f32 %v806, 1.0
    %v817 = vadd.f32 %v808, 1.0
    %v818 = vadd.f32 %v810, 1.0
    %v819 = vrcp.pop %v811
    %v820 = vmul.f32 1.0, %v819
    %v821 = vrcp.pop %v812
    %v822 = vmul.f32 1.0, %v821
    %v823 = vrcp.pop %v813
    %v824 = vmul.f32 1.0, %v823
    %v825 = vrcp.pop %v814
    %v826 = vmul.f32 1.0, %v825
    %v827 = vrcp.pop %v815
    %v828 = vmul.f32 1.0, %v827
    %v829 = vrcp.pop %v816
    %v830 = vmul.f32 1.0, %v829
    %v831 = vrcp.pop %v817
    %v832 = vmul.f32 1.0, %v831
    %v833 = vrcp.pop %v818
    %v834 = vmul.f32 1.0, %v833
    %843 = vrot.lane.b32.xlu0 %v820, 96
    %v844 = vpop.permute.xlu0 %843
    %845 = vrot.lane.b32.xlu0 %v822, 96
    %v846 = vpop.permute.xlu0 %845
    %847 = vrot.lane.b32.xlu0 %v824, 96
    %v848 = vpop.permute.xlu0 %847
    %849 = vrot.lane.b32.xlu0 %v826, 96
    %v850 = vpop.permute.xlu0 %849
    %851 = vrot.lane.b32.xlu0 %v828, 96
    %v852 = vpop.permute.xlu0 %851
    %853 = vrot.lane.b32.xlu0 %v830, 96
    %v854 = vpop.permute.xlu0 %853
    %855 = vrot.lane.b32.xlu0 %v832, 96
    %v856 = vpop.permute.xlu0 %855
    %857 = vrot.lane.b32.xlu0 %v834, 96
    %v858 = vpop.permute.xlu0 %857
    %v867 = vmul.f32 %v779, %v844
    %v868 = vmul.f32 %v780, %v846
    %v869 = vmul.f32 %v781, %v848
    %v870 = vmul.f32 %v782, %v850
    %v871 = vmul.f32 %v783, %v852
    %v872 = vmul.f32 %v784, %v854
    %v873 = vmul.f32 %v785, %v856
    %v874 = vmul.f32 %v786, %v858
    %v875 = vadd.f32 %v867, %v157
    %v876 = vadd.f32 %v868, %v160
    %v877 = vadd.f32 %v869, %v165
    %v878 = vadd.f32 %v870, %v168
    %v879 = vadd.f32 %v871, %v173
    %v880 = vadd.f32 %v872, %v176
    %v881 = vadd.f32 %v873, %v181
    %v882 = vadd.f32 %v874, %v184
    %v883 = vmul.f32 %v875, 0.70710677
    %v884 = vmul.f32 %v876, 0.70710677
    %v885 = vmul.f32 %v877, 0.70710677
    %v886 = vmul.f32 %v878, 0.70710677
    %v887 = vmul.f32 %v879, 0.70710677
    %v888 = vmul.f32 %v880, 0.70710677
    %v889 = vmul.f32 %v881, 0.70710677
    %v890 = vmul.f32 %v882, 0.70710677
    %v891 = vadd.f32 %v883, %v157
    %v892 = vadd.f32 %v884, %v160
    %v893 = vadd.f32 %v885, %v165
    %v894 = vadd.f32 %v886, %v168
    %v895 = vadd.f32 %v887, %v173
    %v896 = vadd.f32 %v888, %v176
    %v897 = vadd.f32 %v889, %v181
    %v898 = vadd.f32 %v890, %v184
    %v899 = vmul.f32 %v891, 0.70710677
    %v900 = vmul.f32 %v892, 0.70710677
    %v901 = vmul.f32 %v893, 0.70710677
    %v902 = vmul.f32 %v894, 0.70710677
    %v903 = vmul.f32 %v895, 0.70710677
    %v904 = vmul.f32 %v896, 0.70710677
    %v905 = vmul.f32 %v897, 0.70710677
    %v906 = vmul.f32 %v898, 0.70710677
    %v907 = vld [vmem:[%s2] sm:$0xf]
    %v908 = vld [vmem:[%s2 + $0x4] sm:$0xf]
    %v909 = vld [vmem:[%s7] sm:$0xf]
    %v910 = vld [vmem:[%s7 + $0x4] sm:$0xf]
    %v911 = vld [vmem:[%s7 + $0x8] sm:$0xf]
    %v912 = vld [vmem:[%s7 + $0xc] sm:$0xf]
    %v913 = vld [vmem:[%s8] sm:$0x1]
    %v915 = vlaneseq
    %v916 = vshrl.u32 %v915, 7
    %v917 = vsub.s32 0, %v916
    %v918 = vrot.slane %v913, %v917
    %v922 = vunpack.c.l.b16 %v907
    %v923 = vunpack.c.l.b16 %v908
    %v924 = vpack.c.b16 %v923, %v922
    %v929 = vunpack.c.l.b16 %v909
    %v930 = vunpack.c.l.b16 %v910
    %v931 = vunpack.c.l.b16 %v911
    %v932 = vunpack.c.l.b16 %v912
    %v933 = vpack.c.b16 %v930, %v929
    %v934 = vpack.c.b16 %v932, %v931
    %v938 = vsel %vm109, %v924, 0
    %940 = vmatprep.subr.bf16.mxu0 0
    %941 = vmatpush1.bf16.msra.mxu0 %v933
    %942 = vmatprep.subr.bf16.mxu0 0
    %943 = vmatpush1.bf16.msra.mxu0 %v934
    %944 = vmatprep.subr.bf16.mxu0 0
    %945 = vmatpush1.bf16.msra.mxu0 0
    %946 = vmatprep.subr.bf16.mxu0 0
    %947 = vmatpush1.bf16.msra.mxu0 0
    %948 = vmatprep.subr.bf16.mxu0 0
    %949 = vmatpush1.bf16.msra.mxu0 0
    %950 = vmatprep.subr.bf16.mxu0 0
    %951 = vmatpush1.bf16.msra.mxu0 0
    %952 = vmatprep.subr.bf16.mxu0 0
    %953 = vmatpush1.bf16.msra.mxu0 0
    %954 = vmatprep.subr.bf16.mxu0 0
    %955 = vmatpush1.bf16.msra.mxu0 0
    %956 = vmatprep.subr.bf16.mxu0 0
    %957 = vmatpush1.bf16.msra.mxu0 0
    %958 = vmatprep.subr.bf16.mxu0 0
    %959 = vmatpush1.bf16.msra.mxu0 0
    %960 = vmatprep.subr.bf16.mxu0 0
    %961 = vmatpush1.bf16.msra.mxu0 0
    %962 = vmatprep.subr.bf16.mxu0 0
    %963 = vmatpush1.bf16.msra.mxu0 0
    %964 = vmatprep.subr.bf16.mxu0 0
    %965 = vmatpush1.bf16.msra.mxu0 0
    %966 = vmatprep.subr.bf16.mxu0 0
    %967 = vmatpush1.bf16.msra.mxu0 0
    %968 = vmatprep.subr.bf16.mxu0 0
    %969 = vmatpush1.bf16.msra.mxu0 0
    %970 = vmatprep.subr.bf16.mxu0 0
    %971 = vmatpush1.bf16.msra.mxu0 0
    %972 = vmatprep.mubr.bf16.mxu0 0
    %973 = vmatmul.mubr.bf16.gmra.mrb[0].mxu0 %v938
    %v974 = vpop.f32.mrb[0].mxu0
    %v975 = vadd.f32 %v918, %v974
    %v976 = vpop.f32.mrb[0].mxu0
    %v977 = vpop.f32.mrb[0].mxu0
    %v978 = vadd.f32 %v918, %v977
    %v979 = vpop.f32.mrb[0].mxu0
    %980 = vdwg.mxu0
    %vm981 = vcmp.lt.s32.totalorder %v188, 0
    %v982 = vsub.s32 0, %v188
    %v983 = vsel %vm981, %v982, %v188
    %v984 = vshrl.u32 %v983, 3
    %v985 = vand.u32 %v983, 7
    %v986 = vsub.s32 0, %v985
    %v987 = vsel %vm981, %v986, %v985
    %vm988 = vcmp.lt.s32.totalorder %v189, 0
    %v989 = vsub.s32 0, %v189
    %v990 = vsel %vm988, %v989, %v189
    %v991 = vshrl.u32 %v990, 3
    %v992 = vand.u32 %v990, 7
    %v993 = vsub.s32 0, %v992
    %v994 = vsel %vm988, %v993, %v992
    %vm995 = vcmp.ne.s32.totalorder %v987, 0
    %vm996 = vcmp.ne.s32.totalorder %v994, 0
    %vm997 = vcmp.lt.s32.totalorder %v987, 0
    %vm998 = vcmp.lt.s32.totalorder %v994, 0
    %vm999 = vmand %vm997, %vm995
    %vm1000 = vmand %vm998, %vm996
    %v1001 = vadd.s32 %v987, 8
    %v1002 = vadd.s32 %v994, 8
    %v1003 = vsel %vm999, %v1001, %v987
    %v1004 = vsel %vm1000, %v1002, %v994
    %v1005 = vld [vmem:[%s10] sm:$0x1]
    %v1007 = vlaneseq
    %v1008 = vshrl.u32 %v1007, 7
    %v1009 = vsub.s32 0, %v1008
    %v1010 = vrot.slane %v1005, %v1009
    %v1012 = vadd.f32 %v1010, 0.0
    %vm1015 = vcmask 1041408
    %v1016 = vrot.slane %v975, 6
    %v1017 = vrot.slane %v978, 6
    %v1018 = vsel %vm1015, %v1016, %v1017
    %v1021 = vsel %vm1015, 0.0, %v1016
    %v1022 = vadd.s32 %v1003, 4294967294
    %v1023 = vadd.s32 %v1004, 4294967294
    %vm1024 = vcmp.ge.s32.totalorder %v1022, 0
    %vm1025 = vcmp.ge.s32.totalorder %v1023, 0
    %vm1026 = vcmp.lt.s32.totalorder %v1022, 8
    %vm1027 = vcmp.lt.s32.totalorder %v1023, 8
    %vm1028 = vmand %vm1024, %vm1026
    %vm1029 = vmand %vm1025, %vm1027
    %v1030 = vsel %vm1028, 1, 0
    %v1031 = vsel %vm1029, 1, 0
    %vm1032 = vcmp.eq.s32.totalorder %v1030, 1
    %vm1033 = vcmp.eq.s32.totalorder %v1031, 1
    %v1034 = vsel %vm1032, %v1021, 0.0
    %v1035 = vsel %vm1033, %v1018, 0.0
    %v1036 = vpack.c.bf16 %v1035, %v1034
    %v1037 = vld [vmem:[%s9] sm:$0xf]
    %v1038 = vld [vmem:[%s9 + $0x4] sm:$0xf]
    %v1039 = vld [vmem:[%s9 + $0x8] sm:$0xf]
    %v1040 = vld [vmem:[%s9 + $0xc] sm:$0xf]
    %v1045 = vunpack.c.l.b16 %v1037
    %v1046 = vunpack.c.l.b16 %v1038
    %v1047 = vunpack.c.l.b16 %v1039
    %v1048 = vunpack.c.l.b16 %v1040
    %v1049 = vpack.c.b16 %v1046, %v1045
    %v1050 = vpack.c.b16 %v1048, %v1047
    %v1054 = vsel %vm109, %v1036, 0
    %1056 = vmatprep.subr.bf16.mxu0 0
    %1057 = vmatpush1.bf16.msra.mxu0 %v1049
    %1058 = vmatprep.subr.bf16.mxu0 0
    %1059 = vmatpush1.bf16.msra.mxu0 %v1050
    %1060 = vmatprep.subr.bf16.mxu0 0
    %1061 = vmatpush1.bf16.msra.mxu0 0
    %1062 = vmatprep.subr.bf16.mxu0 0
    %1063 = vmatpush1.bf16.msra.mxu0 0
    %1064 = vmatprep.subr.bf16.mxu0 0
    %1065 = vmatpush1.bf16.msra.mxu0 0
    %1066 = vmatprep.subr.bf16.mxu0 0
    %1067 = vmatpush1.bf16.msra.mxu0 0
    %1068 = vmatprep.subr.bf16.mxu0 0
    %1069 = vmatpush1.bf16.msra.mxu0 0
    %1070 = vmatprep.subr.bf16.mxu0 0
    %1071 = vmatpush1.bf16.msra.mxu0 0
    %1072 = vmatprep.subr.bf16.mxu0 0
    %1073 = vmatpush1.bf16.msra.mxu0 0
    %1074 = vmatprep.subr.bf16.mxu0 0
    %1075 = vmatpush1.bf16.msra.mxu0 0
    %1076 = vmatprep.subr.bf16.mxu0 0
    %1077 = vmatpush1.bf16.msra.mxu0 0
    %1078 = vmatprep.subr.bf16.mxu0 0
    %1079 = vmatpush1.bf16.msra.mxu0 0
    %1080 = vmatprep.subr.bf16.mxu0 0
    %1081 = vmatpush1.bf16.msra.mxu0 0
    %1082 = vmatprep.subr.bf16.mxu0 0
    %1083 = vmatpush1.bf16.msra.mxu0 0
    %1084 = vmatprep.subr.bf16.mxu0 0
    %1085 = vmatpush1.bf16.msra.mxu0 0
    %1086 = vmatprep.subr.bf16.mxu0 0
    %1087 = vmatpush1.bf16.msra.mxu0 0
    %1088 = vmatprep.mubr.bf16.mxu0 0
    %1089 = vmatmul.mubr.bf16.gmra.mrb[0].mxu0 %v1054
    %v1090 = vpop.f32.mrb[0].mxu0
    %v1091 = vadd.f32 0.0, %v1090
    %v1092 = vpop.f32.mrb[0].mxu0
    %v1093 = vpop.f32.mrb[0].mxu0
    %v1094 = vadd.f32 0.0, %v1093
    %v1095 = vpop.f32.mrb[0].mxu0
    %1096 = vdwg.mxu0
    %v1097 = vadd.f32 %v1012, %v1091
    %v1098 = vadd.f32 %v1012, %v1094
    %v1099 = vrot.slane %v975, 7
    %v1100 = vrot.slane %v978, 7
    %v1101 = vsel %vm308, %v1099, %v1100
    %v1104 = vsel %vm308, 0.0, %v1099
    %v1105 = vadd.s32 %v1003, 4294967295
    %v1106 = vadd.s32 %v1004, 4294967295
    %vm1107 = vcmp.ge.s32.totalorder %v1105, 0
    %vm1108 = vcmp.ge.s32.totalorder %v1106, 0
    %vm1109 = vcmp.lt.s32.totalorder %v1105, 8
    %vm1110 = vcmp.lt.s32.totalorder %v1106, 8
    %vm1111 = vmand %vm1107, %vm1109
    %vm1112 = vmand %vm1108, %vm1110
    %v1113 = vsel %vm1111, 1, 0
    %v1114 = vsel %vm1112, 1, 0
    %vm1115 = vcmp.eq.s32.totalorder %v1113, 1
    %vm1116 = vcmp.eq.s32.totalorder %v1114, 1
    %v1117 = vsel %vm1115, %v1104, 0.0
    %v1118 = vsel %vm1116, %v1101, 0.0
    %v1119 = vpack.c.bf16 %v1118, %v1117
    %s1120 = scalar_lea.vmem %s9, 16
    %v1121 = vld [vmem:[%s1120] sm:$0xf]
    %v1122 = vld [vmem:[%s1120 + $0x4] sm:$0xf]
    %v1123 = vld [vmem:[%s1120 + $0x8] sm:$0xf]
    %v1124 = vld [vmem:[%s1120 + $0xc] sm:$0xf]
    %v1129 = vunpack.c.l.b16 %v1121
    %v1130 = vunpack.c.l.b16 %v1122
    %v1131 = vunpack.c.l.b16 %v1123
    %v1132 = vunpack.c.l.b16 %v1124
    %v1133 = vpack.c.b16 %v1130, %v1129
    %v1134 = vpack.c.b16 %v1132, %v1131
    %v1138 = vsel %vm109, %v1119, 0
    %1140 = vmatprep.subr.bf16.mxu0 0
    %1141 = vmatpush1.bf16.msra.mxu0 %v1133
    %1142 = vmatprep.subr.bf16.mxu0 0
    %1143 = vmatpush1.bf16.msra.mxu0 %v1134
    %1144 = vmatprep.subr.bf16.mxu0 0
    %1145 = vmatpush1.bf16.msra.mxu0 0
    %1146 = vmatprep.subr.bf16.mxu0 0
    %1147 = vmatpush1.bf16.msra.mxu0 0
    %1148 = vmatprep.subr.bf16.mxu0 0
    %1149 = vmatpush1.bf16.msra.mxu0 0
    %1150 = vmatprep.subr.bf16.mxu0 0
    %1151 = vmatpush1.bf16.msra.mxu0 0
    %1152 = vmatprep.subr.bf16.mxu0 0
    %1153 = vmatpush1.bf16.msra.mxu0 0
    %1154 = vmatprep.subr.bf16.mxu0 0
    %1155 = vmatpush1.bf16.msra.mxu0 0
    %1156 = vmatprep.subr.bf16.mxu0 0
    %1157 = vmatpush1.bf16.msra.mxu0 0
    %1158 = vmatprep.subr.bf16.mxu0 0
    %1159 = vmatpush1.bf16.msra.mxu0 0
    %1160 = vmatprep.subr.bf16.mxu0 0
    %1161 = vmatpush1.bf16.msra.mxu0 0
    %1162 = vmatprep.subr.bf16.mxu0 0
    %1163 = vmatpush1.bf16.msra.mxu0 0
    %1164 = vmatprep.subr.bf16.mxu0 0
    %1165 = vmatpush1.bf16.msra.mxu0 0
    %1166 = vmatprep.subr.bf16.mxu0 0
    %1167 = vmatpush1.bf16.msra.mxu0 0
    %1168 = vmatprep.subr.bf16.mxu0 0
    %1169 = vmatpush1.bf16.msra.mxu0 0
    %1170 = vmatprep.subr.bf16.mxu0 0
    %1171 = vmatpush1.bf16.msra.mxu0 0
    %1172 = vmatprep.mubr.bf16.mxu0 0
    %1173 = vmatmul.mubr.bf16.gmra.mrb[0].mxu0 %v1138
    %v1174 = vpop.f32.mrb[0].mxu0
    %v1175 = vadd.f32 0.0, %v1174
    %v1176 = vpop.f32.mrb[0].mxu0
    %v1177 = vpop.f32.mrb[0].mxu0
    %v1178 = vadd.f32 0.0, %v1177
    %v1179 = vpop.f32.mrb[0].mxu0
    %1180 = vdwg.mxu0
    %v1181 = vadd.f32 %v1097, %v1175
    %v1182 = vadd.f32 %v1098, %v1178
    %v1183 = vpack.c.bf16 %v978, %v975
    %s1184 = scalar_lea.vmem %s9, 32
    %v1185 = vld [vmem:[%s1184] sm:$0xf]
    %v1186 = vld [vmem:[%s1184 + $0x4] sm:$0xf]
    %v1187 = vld [vmem:[%s1184 + $0x8] sm:$0xf]
    %v1188 = vld [vmem:[%s1184 + $0xc] sm:$0xf]
    %v1193 = vunpack.c.l.b16 %v1185
    %v1194 = vunpack.c.l.b16 %v1186
    %v1195 = vunpack.c.l.b16 %v1187
    %v1196 = vunpack.c.l.b16 %v1188
    %v1197 = vpack.c.b16 %v1194, %v1193
    %v1198 = vpack.c.b16 %v1196, %v1195
    %v1202 = vsel %vm109, %v1183, 0
    %1204 = vmatprep.subr.bf16.mxu0 0
    %1205 = vmatpush1.bf16.msra.mxu0 %v1197
    %1206 = vmatprep.subr.bf16.mxu0 0
    %1207 = vmatpush1.bf16.msra.mxu0 %v1198
    %1208 = vmatprep.subr.bf16.mxu0 0
    %1209 = vmatpush1.bf16.msra.mxu0 0
    %1210 = vmatprep.subr.bf16.mxu0 0
    %1211 = vmatpush1.bf16.msra.mxu0 0
    %1212 = vmatprep.subr.bf16.mxu0 0
    %1213 = vmatpush1.bf16.msra.mxu0 0
    %1214 = vmatprep.subr.bf16.mxu0 0
    %1215 = vmatpush1.bf16.msra.mxu0 0
    %1216 = vmatprep.subr.bf16.mxu0 0
    %1217 = vmatpush1.bf16.msra.mxu0 0
    %1218 = vmatprep.subr.bf16.mxu0 0
    %1219 = vmatpush1.bf16.msra.mxu0 0
    %1220 = vmatprep.subr.bf16.mxu0 0
    %1221 = vmatpush1.bf16.msra.mxu0 0
    %1222 = vmatprep.subr.bf16.mxu0 0
    %1223 = vmatpush1.bf16.msra.mxu0 0
    %1224 = vmatprep.subr.bf16.mxu0 0
    %1225 = vmatpush1.bf16.msra.mxu0 0
    %1226 = vmatprep.subr.bf16.mxu0 0
    %1227 = vmatpush1.bf16.msra.mxu0 0
    %1228 = vmatprep.subr.bf16.mxu0 0
    %1229 = vmatpush1.bf16.msra.mxu0 0
    %1230 = vmatprep.subr.bf16.mxu0 0
    %1231 = vmatpush1.bf16.msra.mxu0 0
    %1232 = vmatprep.subr.bf16.mxu0 0
    %1233 = vmatpush1.bf16.msra.mxu0 0
    %1234 = vmatprep.subr.bf16.mxu0 0
    %1235 = vmatpush1.bf16.msra.mxu0 0
    %1236 = vmatprep.mubr.bf16.mxu0 0
    %1237 = vmatmul.mubr.bf16.gmra.mrb[0].mxu0 %v1202
    %v1238 = vpop.f32.mrb[0].mxu0
    %v1239 = vadd.f32 0.0, %v1238
    %v1240 = vpop.f32.mrb[0].mxu0
    %v1241 = vpop.f32.mrb[0].mxu0
    %v1242 = vadd.f32 0.0, %v1241
    %v1243 = vpop.f32.mrb[0].mxu0
    %1244 = vdwg.mxu0
    %v1245 = vadd.f32 %v1181, %v1239
    %v1246 = vadd.f32 %v1182, %v1242
    %v1247 = vxor.u32 %v1245, 2147483648
    %v1248 = vxor.u32 %v1246, 2147483648
    %v1249 = vmul.f32 %v1247, 1.442695
    %v1250 = vpow.pop %v1249
    %v1251 = vmul.f32 %v1248, 1.442695
    %v1252 = vpow.pop %v1251
    %v1253 = vadd.f32 %v1250, 1.0
    %v1254 = vadd.f32 %v1252, 1.0
    %v1255 = vrcp.pop %v1253
    %v1256 = vmul.f32 1.0, %v1255
    %v1257 = vrcp.pop %v1254
    %v1258 = vmul.f32 1.0, %v1257
    %1261 = vrot.lane.b32.xlu0 %v1256, 96
    %v1262 = vpop.permute.xlu0 %1261
    %1263 = vrot.lane.b32.xlu0 %v1258, 96
    %v1264 = vpop.permute.xlu0 %1263
    %v1267 = vmul.f32 %v1245, %v1262
    %v1268 = vmul.f32 %v1246, %v1264
    %v1269 = vadd.f32 %v1267, %v975
    %v1270 = vadd.f32 %v1268, %v978
    %v1271 = vmul.f32 %v1269, 0.70710677
    %v1272 = vmul.f32 %v1270, 0.70710677
    %v1273 = vmul.f32 %v1271, 0.17677669
    %v1274 = vmul.f32 %v1272, 0.17677669
    %v1275 = vpack.c.bf16 %v1274, %v1273
    %v1277 = vunpack.c.l.b16 %v1275
    %v1278 = vunpack.c.h.b16 %v1275
    %v1279 = vpack.c.b16 %v1277, %v1277
    %v1280 = vpack.c.b16 %v1278, %v1278
    %v1281 = vpack.c.bf16 %v900, %v899
    %v1282 = vpack.c.bf16 %v902, %v901
    %v1284 = vsel %vm109, %v1279, 0
    %v1287 = vsel %vm109, %v1281, 0
    %1289 = vmatprep.subr.bf16.mxu0 0
    %1290 = vmatpush1.bf16.xpose.msra.mxu0 %v1287
    %1291 = vmatprep.subr.bf16.mxu0 0
    %1292 = vmatpush1.bf16.xpose.msra.mxu0 0
    %1293 = vmatprep.subr.bf16.mxu0 0
    %1294 = vmatpush1.bf16.xpose.msra.mxu0 0
    %1295 = vmatprep.subr.bf16.mxu0 0
    %1296 = vmatpush1.bf16.xpose.msra.mxu0 0
    %1297 = vmatprep.subr.bf16.mxu0 0
    %1298 = vmatpush1.bf16.xpose.msra.mxu0 0
    %1299 = vmatprep.subr.bf16.mxu0 0
    %1300 = vmatpush1.bf16.xpose.msra.mxu0 0
    %1301 = vmatprep.subr.bf16.mxu0 0
    %1302 = vmatpush1.bf16.xpose.msra.mxu0 0
    %1303 = vmatprep.subr.bf16.mxu0 0
    %1304 = vmatpush1.bf16.xpose.msra.mxu0 0
    %1305 = vmatprep.subr.bf16.mxu0 0
    %1306 = vmatpush1.bf16.xpose.msra.mxu0 0
    %1307 = vmatprep.subr.bf16.mxu0 0
    %1308 = vmatpush1.bf16.xpose.msra.mxu0 0
    %1309 = vmatprep.subr.bf16.mxu0 0
    %1310 = vmatpush1.bf16.xpose.msra.mxu0 0
    %1311 = vmatprep.subr.bf16.mxu0 0
    %1312 = vmatpush1.bf16.xpose.msra.mxu0 0
    %1313 = vmatprep.subr.bf16.mxu0 0
    %1314 = vmatpush1.bf16.xpose.msra.mxu0 0
    %1315 = vmatprep.subr.bf16.mxu0 0
    %1316 = vmatpush1.bf16.xpose.msra.mxu0 0
    %1317 = vmatprep.subr.bf16.mxu0 0
    %1318 = vmatpush1.bf16.xpose.msra.mxu0 0
    %1319 = vmatprep.subr.bf16.mxu0 0
    %1320 = vmatpush1.bf16.xpose.msra.mxu0 0
    %1321 = vmatprep.mubr.bf16.mxu0 0
    %1322 = vmatmul.mubr.bf16.gmra.mrb[0].mxu0 %v1284
    %v1323 = vpop.f32.mrb[0].mxu0
    %v1324 = vadd.f32 0.0, %v1323
    %v1325 = vpop.f32.mrb[0].mxu0
    %v1326 = vpop.f32.mrb[0].mxu0
    %v1327 = vpop.f32.mrb[0].mxu0
    %1328 = vdwg.mxu0
    %v1330 = vsel %vm109, %v1280, 0
    %v1333 = vsel %vm109, %v1282, 0
    %1335 = vmatprep.subr.bf16.mxu0 0
    %1336 = vmatpush1.bf16.xpose.msra.mxu0 %v1333
    %1337 = vmatprep.subr.bf16.mxu0 0
    %1338 = vmatpush1.bf16.xpose.msra.mxu0 0
    %1339 = vmatprep.subr.bf16.mxu0 0
    %1340 = vmatpush1.bf16.xpose.msra.mxu0 0
    %1341 = vmatprep.subr.bf16.mxu0 0
    %1342 = vmatpush1.bf16.xpose.msra.mxu0 0
    %1343 = vmatprep.subr.bf16.mxu0 0
    %1344 = vmatpush1.bf16.xpose.msra.mxu0 0
    %1345 = vmatprep.subr.bf16.mxu0 0
    %1346 = vmatpush1.bf16.xpose.msra.mxu0 0
    %1347 = vmatprep.subr.bf16.mxu0 0
    %1348 = vmatpush1.bf16.xpose.msra.mxu0 0
    %1349 = vmatprep.subr.bf16.mxu0 0
    %1350 = vmatpush1.bf16.xpose.msra.mxu0 0
    %1351 = vmatprep.subr.bf16.mxu0 0
    %1352 = vmatpush1.bf16.xpose.msra.mxu0 0
    %1353 = vmatprep.subr.bf16.mxu0 0
    %1354 = vmatpush1.bf16.xpose.msra.mxu0 0
    %1355 = vmatprep.subr.bf16.mxu0 0
    %1356 = vmatpush1.bf16.xpose.msra.mxu0 0
    %1357 = vmatprep.subr.bf16.mxu0 0
    %1358 = vmatpush1.bf16.xpose.msra.mxu0 0
    %1359 = vmatprep.subr.bf16.mxu0 0
    %1360 = vmatpush1.bf16.xpose.msra.mxu0 0
    %1361 = vmatprep.subr.bf16.mxu0 0
    %1362 = vmatpush1.bf16.xpose.msra.mxu0 0
    %1363 = vmatprep.subr.bf16.mxu0 0
    %1364 = vmatpush1.bf16.xpose.msra.mxu0 0
    %1365 = vmatprep.subr.bf16.mxu0 0
    %1366 = vmatpush1.bf16.xpose.msra.mxu0 0
    %1367 = vmatprep.mubr.bf16.mxu0 0
    %1368 = vmatmul.mubr.bf16.gmra.mrb[0].mxu0 %v1330
    %v1369 = vpop.f32.mrb[0].mxu0
    %v1370 = vadd.f32 0.0, %v1369
    %v1371 = vpop.f32.mrb[0].mxu0
    %v1372 = vpop.f32.mrb[0].mxu0
    %v1373 = vpop.f32.mrb[0].mxu0
    %1374 = vdwg.mxu0
    %v1375 = vlaneseq
    %v1376 = vand.u32 %v1375, 127
    %s1377 = sld [smem:[#allocation2]]
    %v1378 = vstv %s1377
    %vm1379 = vcmp.lt.s32.totalorder %v1376, %v1378
    %v1380 = vsel %vm1379, %v1324, -1e+30
    %s1381 = sld [smem:[#allocation2 + $0x1]]
    %v1382 = vstv %s1381
    %vm1383 = vcmp.lt.s32.totalorder %v1376, %v1382
    %v1384 = vsel %vm1383, %v1370, -1e+30
    %vm1385 = vcmask 130048
    %v1386 = vsel %vm1385, %v1380, -inf
    %1387 = vmax.xlane.f32.xlu0 %v1386
    %v1388 = vpop.xlane.xlu0 %1387
    %v1389 = vsel %vm1385, %v1384, -inf
    %1390 = vmax.xlane.f32.xlu0 %v1389
    %v1391 = vpop.xlane.xlu0 %1390
    %v1392 = vsub.f32 %v1380, %v1388
    %v1393 = vsub.f32 %v1384, %v1391
    %v1394 = vmul.f32 %v1392, 1.442695
    %v1395 = vpow.pop %v1394
    %v1396 = vmul.f32 %v1393, 1.442695
    %v1397 = vpow.pop %v1396
    %v1398 = vsel %vm1385, %v1395, 0.0
    %1399 = vadd.xlane.f32.xlu0 %v1398
    %v1400 = vpop.xlane.xlu0 %1399
    %v1401 = vsel %vm1385, %v1397, 0.0
    %1402 = vadd.xlane.f32.xlu0 %v1401
    %v1403 = vpop.xlane.xlu0 %1402
    %v1404 = vrcp.pop %v1400
    %v1405 = vrcp.pop %v1403
    %v1406 = vmul.f32 %v1395, %v1404
    %v1407 = vmul.f32 %v1397, %v1405
    %v1408 = vpack.c.bf16 %v1406, %v1406
    %v1409 = vpack.c.bf16 %v1407, %v1407
    %v1411 = vsel %vm1385, %v1408, 0
    %1413 = vmatprep.subr.bf16.mxu0 0
    %1414 = vmatpush1.bf16.msra.mxu0 %v1281
    %1415 = vmatprep.subr.bf16.mxu0 0
    %1416 = vmatpush1.bf16.msra.mxu0 0
    %1417 = vmatprep.subr.bf16.mxu0 0
    %1418 = vmatpush1.bf16.msra.mxu0 0
    %1419 = vmatprep.subr.bf16.mxu0 0
    %1420 = vmatpush1.bf16.msra.mxu0 0
    %1421 = vmatprep.subr.bf16.mxu0 0
    %1422 = vmatpush1.bf16.msra.mxu0 0
    %1423 = vmatprep.subr.bf16.mxu0 0
    %1424 = vmatpush1.bf16.msra.mxu0 0
    %1425 = vmatprep.subr.bf16.mxu0 0
    %1426 = vmatpush1.bf16.msra.mxu0 0
    %1427 = vmatprep.subr.bf16.mxu0 0
    %1428 = vmatpush1.bf16.msra.mxu0 0
    %1429 = vmatprep.subr.bf16.mxu0 0
    %1430 = vmatpush1.bf16.msra.mxu0 0
    %1431 = vmatprep.subr.bf16.mxu0 0
    %1432 = vmatpush1.bf16.msra.mxu0 0
    %1433 = vmatprep.subr.bf16.mxu0 0
    %1434 = vmatpush1.bf16.msra.mxu0 0
    %1435 = vmatprep.subr.bf16.mxu0 0
    %1436 = vmatpush1.bf16.msra.mxu0 0
    %1437 = vmatprep.subr.bf16.mxu0 0
    %1438 = vmatpush1.bf16.msra.mxu0 0
    %1439 = vmatprep.subr.bf16.mxu0 0
    %1440 = vmatpush1.bf16.msra.mxu0 0
    %1441 = vmatprep.subr.bf16.mxu0 0
    %1442 = vmatpush1.bf16.msra.mxu0 0
    %1443 = vmatprep.subr.bf16.mxu0 0
    %1444 = vmatpush1.bf16.msra.mxu0 0
    %1445 = vmatprep.mubr.bf16.mxu0 0
    %1446 = vmatmul.mubr.bf16.gmra.mrb[0].mxu0 %v1411
    %v1447 = vpop.f32.mrb[0].mxu0
    %v1448 = vadd.f32 0.0, %v1447
    %v1449 = vpop.f32.mrb[0].mxu0
    %v1450 = vpop.f32.mrb[0].mxu0
    %v1451 = vpop.f32.mrb[0].mxu0
    %1452 = vdwg.mxu0
    %v1454 = vsel %vm1385, %v1409, 0
    %1456 = vmatprep.subr.bf16.mxu0 0
    %1457 = vmatpush1.bf16.msra.mxu0 %v1282
    %1458 = vmatprep.subr.bf16.mxu0 0
    %1459 = vmatpush1.bf16.msra.mxu0 0
    %1460 = vmatprep.subr.bf16.mxu0 0
    %1461 = vmatpush1.bf16.msra.mxu0 0
    %1462 = vmatprep.subr.bf16.mxu0 0
    %1463 = vmatpush1.bf16.msra.mxu0 0
    %1464 = vmatprep.subr.bf16.mxu0 0
    %1465 = vmatpush1.bf16.msra.mxu0 0
    %1466 = vmatprep.subr.bf16.mxu0 0
    %1467 = vmatpush1.bf16.msra.mxu0 0
    %1468 = vmatprep.subr.bf16.mxu0 0
    %1469 = vmatpush1.bf16.msra.mxu0 0
    %1470 = vmatprep.subr.bf16.mxu0 0
    %1471 = vmatpush1.bf16.msra.mxu0 0
    %1472 = vmatprep.subr.bf16.mxu0 0
    %1473 = vmatpush1.bf16.msra.mxu0 0
    %1474 = vmatprep.subr.bf16.mxu0 0
    %1475 = vmatpush1.bf16.msra.mxu0 0
    %1476 = vmatprep.subr.bf16.mxu0 0
    %1477 = vmatpush1.bf16.msra.mxu0 0
    %1478 = vmatprep.subr.bf16.mxu0 0
    %1479 = vmatpush1.bf16.msra.mxu0 0
    %1480 = vmatprep.subr.bf16.mxu0 0
    %1481 = vmatpush1.bf16.msra.mxu0 0
    %1482 = vmatprep.subr.bf16.mxu0 0
    %1483 = vmatpush1.bf16.msra.mxu0 0
    %1484 = vmatprep.subr.bf16.mxu0 0
    %1485 = vmatpush1.bf16.msra.mxu0 0
    %1486 = vmatprep.subr.bf16.mxu0 0
    %1487 = vmatpush1.bf16.msra.mxu0 0
    %1488 = vmatprep.mubr.bf16.mxu0 0
    %1489 = vmatmul.mubr.bf16.gmra.mrb[0].mxu0 %v1454
    %v1490 = vpop.f32.mrb[0].mxu0
    %v1491 = vadd.f32 0.0, %v1490
    %v1492 = vpop.f32.mrb[0].mxu0
    %v1493 = vpop.f32.mrb[0].mxu0
    %v1494 = vpop.f32.mrb[0].mxu0
    %1495 = vdwg.mxu0
    %v1496 = vpack.c.bf16 %v904, %v903
    %v1497 = vpack.c.bf16 %v906, %v905
    %v1499 = vsel %vm109, %v1496, 0
    %1501 = vmatprep.subr.bf16.mxu0 0
    %1502 = vmatpush1.bf16.xpose.msra.mxu0 %v1499
    %1503 = vmatprep.subr.bf16.mxu0 0
    %1504 = vmatpush1.bf16.xpose.msra.mxu0 0
    %1505 = vmatprep.subr.bf16.mxu0 0
    %1506 = vmatpush1.bf16.xpose.msra.mxu0 0
    %1507 = vmatprep.subr.bf16.mxu0 0
    %1508 = vmatpush1.bf16.xpose.msra.mxu0 0
    %1509 = vmatprep.subr.bf16.mxu0 0
    %1510 = vmatpush1.bf16.xpose.msra.mxu0 0
    %1511 = vmatprep.subr.bf16.mxu0 0
    %1512 = vmatpush1.bf16.xpose.msra.mxu0 0
    %1513 = vmatprep.subr.bf16.mxu0 0
    %1514 = vmatpush1.bf16.xpose.msra.mxu0 0
    %1515 = vmatprep.subr.bf16.mxu0 0
    %1516 = vmatpush1.bf16.xpose.msra.mxu0 0
    %1517 = vmatprep.subr.bf16.mxu0 0
    %1518 = vmatpush1.bf16.xpose.msra.mxu0 0
    %1519 = vmatprep.subr.bf16.mxu0 0
    %1520 = vmatpush1.bf16.xpose.msra.mxu0 0
    %1521 = vmatprep.subr.bf16.mxu0 0
    %1522 = vmatpush1.bf16.xpose.msra.mxu0 0
    %1523 = vmatprep.subr.bf16.mxu0 0
    %1524 = vmatpush1.bf16.xpose.msra.mxu0 0
    %1525 = vmatprep.subr.bf16.mxu0 0
    %1526 = vmatpush1.bf16.xpose.msra.mxu0 0
    %1527 = vmatprep.subr.bf16.mxu0 0
    %1528 = vmatpush1.bf16.xpose.msra.mxu0 0
    %1529 = vmatprep.subr.bf16.mxu0 0
    %1530 = vmatpush1.bf16.xpose.msra.mxu0 0
    %1531 = vmatprep.subr.bf16.mxu0 0
    %1532 = vmatpush1.bf16.xpose.msra.mxu0 0
    %1533 = vmatprep.mubr.bf16.mxu0 0
    %1534 = vmatmul.mubr.bf16.gmra.mrb[0].mxu0 %v1284
    %v1535 = vpop.f32.mrb[0].mxu0
    %v1536 = vadd.f32 0.0, %v1535
    %v1537 = vpop.f32.mrb[0].mxu0
    %v1538 = vpop.f32.mrb[0].mxu0
    %v1539 = vpop.f32.mrb[0].mxu0
    %1540 = vdwg.mxu0
    %v1542 = vsel %vm109, %v1497, 0
    %1544 = vmatprep.subr.bf16.mxu0 0
    %1545 = vmatpush1.bf16.xpose.msra.mxu0 %v1542
    %1546 = vmatprep.subr.bf16.mxu0 0
    %1547 = vmatpush1.bf16.xpose.msra.mxu0 0
    %1548 = vmatprep.subr.bf16.mxu0 0
    %1549 = vmatpush1.bf16.xpose.msra.mxu0 0
    %1550 = vmatprep.subr.bf16.mxu0 0
    %1551 = vmatpush1.bf16.xpose.msra.mxu0 0
    %1552 = vmatprep.subr.bf16.mxu0 0
    %1553 = vmatpush1.bf16.xpose.msra.mxu0 0
    %1554 = vmatprep.subr.bf16.mxu0 0
    %1555 = vmatpush1.bf16.xpose.msra.mxu0 0
    %1556 = vmatprep.subr.bf16.mxu0 0
    %1557 = vmatpush1.bf16.xpose.msra.mxu0 0
    %1558 = vmatprep.subr.bf16.mxu0 0
    %1559 = vmatpush1.bf16.xpose.msra.mxu0 0
    %1560 = vmatprep.subr.bf16.mxu0 0
    %1561 = vmatpush1.bf16.xpose.msra.mxu0 0
    %1562 = vmatprep.subr.bf16.mxu0 0
    %1563 = vmatpush1.bf16.xpose.msra.mxu0 0
    %1564 = vmatprep.subr.bf16.mxu0 0
    %1565 = vmatpush1.bf16.xpose.msra.mxu0 0
    %1566 = vmatprep.subr.bf16.mxu0 0
    %1567 = vmatpush1.bf16.xpose.msra.mxu0 0
    %1568 = vmatprep.subr.bf16.mxu0 0
    %1569 = vmatpush1.bf16.xpose.msra.mxu0 0
    %1570 = vmatprep.subr.bf16.mxu0 0
    %1571 = vmatpush1.bf16.xpose.msra.mxu0 0
    %1572 = vmatprep.subr.bf16.mxu0 0
    %1573 = vmatpush1.bf16.xpose.msra.mxu0 0
    %1574 = vmatprep.subr.bf16.mxu0 0
    %1575 = vmatpush1.bf16.xpose.msra.mxu0 0
    %1576 = vmatprep.mubr.bf16.mxu0 0
    %1577 = vmatmul.mubr.bf16.gmra.mrb[0].mxu0 %v1330
    %v1578 = vpop.f32.mrb[0].mxu0
    %v1579 = vadd.f32 0.0, %v1578
    %v1580 = vpop.f32.mrb[0].mxu0
    %v1581 = vpop.f32.mrb[0].mxu0
    %v1582 = vpop.f32.mrb[0].mxu0
    %1583 = vdwg.mxu0
    %v1584 = vsel %vm1385, %v1536, -inf
    %1585 = vmax.xlane.f32.xlu0 %v1584
    %v1586 = vpop.xlane.xlu0 %1585
    %v1587 = vsel %vm1385, %v1579, -inf
    %1588 = vmax.xlane.f32.xlu0 %v1587
    %v1589 = vpop.xlane.xlu0 %1588
    %v1590 = vsub.f32 %v1536, %v1586
    %v1591 = vsub.f32 %v1579, %v1589
    %v1592 = vmul.f32 %v1590, 1.442695
    %v1593 = vpow.pop %v1592
    %v1594 = vmul.f32 %v1591, 1.442695
    %v1595 = vpow.pop %v1594
    %v1596 = vsel %vm1385, %v1593, 0.0
    %1597 = vadd.xlane.f32.xlu0 %v1596
    %v1598 = vpop.xlane.xlu0 %1597
    %v1599 = vsel %vm1385, %v1595, 0.0
    %1600 = vadd.xlane.f32.xlu0 %v1599
    %v1601 = vpop.xlane.xlu0 %1600
    %v1602 = vrcp.pop %v1598
    %v1603 = vrcp.pop %v1601
    %v1604 = vmul.f32 %v1593, %v1602
    %v1605 = vmul.f32 %v1595, %v1603
    %v1606 = vpack.c.bf16 %v1604, %v1604
    %v1607 = vpack.c.bf16 %v1605, %v1605
    %v1609 = vsel %vm1385, %v1606, 0
    %1611 = vmatprep.subr.bf16.mxu0 0
    %1612 = vmatpush1.bf16.msra.mxu0 %v1496
    %1613 = vmatprep.subr.bf16.mxu0 0
    %1614 = vmatpush1.bf16.msra.mxu0 0
    %1615 = vmatprep.subr.bf16.mxu0 0
    %1616 = vmatpush1.bf16.msra.mxu0 0
    %1617 = vmatprep.subr.bf16.mxu0 0
    %1618 = vmatpush1.bf16.msra.mxu0 0
    %1619 = vmatprep.subr.bf16.mxu0 0
    %1620 = vmatpush1.bf16.msra.mxu0 0
    %1621 = vmatprep.subr.bf16.mxu0 0
    %1622 = vmatpush1.bf16.msra.mxu0 0
    %1623 = vmatprep.subr.bf16.mxu0 0
    %1624 = vmatpush1.bf16.msra.mxu0 0
    %1625 = vmatprep.subr.bf16.mxu0 0
    %1626 = vmatpush1.bf16.msra.mxu0 0
    %1627 = vmatprep.subr.bf16.mxu0 0
    %1628 = vmatpush1.bf16.msra.mxu0 0
    %1629 = vmatprep.subr.bf16.mxu0 0
    %1630 = vmatpush1.bf16.msra.mxu0 0
    %1631 = vmatprep.subr.bf16.mxu0 0
    %1632 = vmatpush1.bf16.msra.mxu0 0
    %1633 = vmatprep.subr.bf16.mxu0 0
    %1634 = vmatpush1.bf16.msra.mxu0 0
    %1635 = vmatprep.subr.bf16.mxu0 0
    %1636 = vmatpush1.bf16.msra.mxu0 0
    %1637 = vmatprep.subr.bf16.mxu0 0
    %1638 = vmatpush1.bf16.msra.mxu0 0
    %1639 = vmatprep.subr.bf16.mxu0 0
    %1640 = vmatpush1.bf16.msra.mxu0 0
    %1641 = vmatprep.subr.bf16.mxu0 0
    %1642 = vmatpush1.bf16.msra.mxu0 0
    %1643 = vmatprep.mubr.bf16.mxu0 0
    %1644 = vmatmul.mubr.bf16.gmra.mrb[0].mxu0 %v1609
    %v1645 = vpop.f32.mrb[0].mxu0
    %v1646 = vadd.f32 0.0, %v1645
    %v1647 = vpop.f32.mrb[0].mxu0
    %v1648 = vpop.f32.mrb[0].mxu0
    %v1649 = vpop.f32.mrb[0].mxu0
    %1650 = vdwg.mxu0
    %v1652 = vsel %vm1385, %v1607, 0
    %1654 = vmatprep.subr.bf16.mxu0 0
    %1655 = vmatpush1.bf16.msra.mxu0 %v1497
    %1656 = vmatprep.subr.bf16.mxu0 0
    %1657 = vmatpush1.bf16.msra.mxu0 0
    %1658 = vmatprep.subr.bf16.mxu0 0
    %1659 = vmatpush1.bf16.msra.mxu0 0
    %1660 = vmatprep.subr.bf16.mxu0 0
    %1661 = vmatpush1.bf16.msra.mxu0 0
    %1662 = vmatprep.subr.bf16.mxu0 0
    %1663 = vmatpush1.bf16.msra.mxu0 0
    %1664 = vmatprep.subr.bf16.mxu0 0
    %1665 = vmatpush1.bf16.msra.mxu0 0
    %1666 = vmatprep.subr.bf16.mxu0 0
    %1667 = vmatpush1.bf16.msra.mxu0 0
    %1668 = vmatprep.subr.bf16.mxu0 0
    %1669 = vmatpush1.bf16.msra.mxu0 0
    %1670 = vmatprep.subr.bf16.mxu0 0
    %1671 = vmatpush1.bf16.msra.mxu0 0
    %1672 = vmatprep.subr.bf16.mxu0 0
    %1673 = vmatpush1.bf16.msra.mxu0 0
    %1674 = vmatprep.subr.bf16.mxu0 0
    %1675 = vmatpush1.bf16.msra.mxu0 0
    %1676 = vmatprep.subr.bf16.mxu0 0
    %1677 = vmatpush1.bf16.msra.mxu0 0
    %1678 = vmatprep.subr.bf16.mxu0 0
    %1679 = vmatpush1.bf16.msra.mxu0 0
    %1680 = vmatprep.subr.bf16.mxu0 0
    %1681 = vmatpush1.bf16.msra.mxu0 0
    %1682 = vmatprep.subr.bf16.mxu0 0
    %1683 = vmatpush1.bf16.msra.mxu0 0
    %1684 = vmatprep.subr.bf16.mxu0 0
    %1685 = vmatpush1.bf16.msra.mxu0 0
    %1686 = vmatprep.mubr.bf16.mxu0 0
    %1687 = vmatmul.mubr.bf16.gmra.mrb[0].mxu0 %v1652
    %v1688 = vpop.f32.mrb[0].mxu0
    %v1689 = vadd.f32 0.0, %v1688
    %v1690 = vpop.f32.mrb[0].mxu0
    %v1691 = vpop.f32.mrb[0].mxu0
    %v1692 = vpop.f32.mrb[0].mxu0
    %1693 = vdwg.mxu0
    %v1694 = vadd.f32 %v1271, %v1448
    %v1695 = vadd.f32 %v1272, %v1491
    %v1696 = vadd.f32 %v1694, %v1646
    %v1697 = vadd.f32 %v1695, %v1689
    %v1698 = vmul.f32 %v1696, 0.57735026
    %v1699 = vmul.f32 %v1697, 0.57735026
    %v1700 = vpack.c.bf16 %v1699, %v1698
    %v1701 = vld [vmem:[%s11] sm:$0xf]
    %v1702 = vld [vmem:[%s11 + $0x4] sm:$0xf]
    %v1703 = vld [vmem:[%s11 + $0x8] sm:$0xf]
    %v1704 = vld [vmem:[%s11 + $0xc] sm:$0xf]
    %v1705 = vld [vmem:[%s12] sm:$0x1]
    %v1707 = vlaneseq
    %v1708 = vshrl.u32 %v1707, 7
    %v1709 = vsub.s32 0, %v1708
    %v1710 = vrot.slane %v1705, %v1709
    %v1716 = vunpack.c.l.b16 %v1701
    %v1717 = vunpack.c.l.b16 %v1702
    %v1718 = vunpack.c.l.b16 %v1703
    %v1719 = vunpack.c.l.b16 %v1704
    %v1720 = vpack.c.b16 %v1717, %v1716
    %v1721 = vpack.c.b16 %v1719, %v1718
    %v1725 = vsel %vm109, %v1700, 0
    %1727 = vmatprep.subr.bf16.mxu0 0
    %1728 = vmatpush1.bf16.msra.mxu0 %v1720
    %1729 = vmatprep.subr.bf16.mxu0 0
    %1730 = vmatpush1.bf16.msra.mxu0 %v1721
    %1731 = vmatprep.subr.bf16.mxu0 0
    %1732 = vmatpush1.bf16.msra.mxu0 0
    %1733 = vmatprep.subr.bf16.mxu0 0
    %1734 = vmatpush1.bf16.msra.mxu0 0
    %1735 = vmatprep.subr.bf16.mxu0 0
    %1736 = vmatpush1.bf16.msra.mxu0 0
    %1737 = vmatprep.subr.bf16.mxu0 0
    %1738 = vmatpush1.bf16.msra.mxu0 0
    %1739 = vmatprep.subr.bf16.mxu0 0
    %1740 = vmatpush1.bf16.msra.mxu0 0
    %1741 = vmatprep.subr.bf16.mxu0 0
    %1742 = vmatpush1.bf16.msra.mxu0 0
    %1743 = vmatprep.subr.bf16.mxu0 0
    %1744 = vmatpush1.bf16.msra.mxu0 0
    %1745 = vmatprep.subr.bf16.mxu0 0
    %1746 = vmatpush1.bf16.msra.mxu0 0
    %1747 = vmatprep.subr.bf16.mxu0 0
    %1748 = vmatpush1.bf16.msra.mxu0 0
    %1749 = vmatprep.subr.bf16.mxu0 0
    %1750 = vmatpush1.bf16.msra.mxu0 0
    %1751 = vmatprep.subr.bf16.mxu0 0
    %1752 = vmatpush1.bf16.msra.mxu0 0
    %1753 = vmatprep.subr.bf16.mxu0 0
    %1754 = vmatpush1.bf16.msra.mxu0 0
    %1755 = vmatprep.subr.bf16.mxu0 0
    %1756 = vmatpush1.bf16.msra.mxu0 0
    %1757 = vmatprep.subr.bf16.mxu0 0
    %1758 = vmatpush1.bf16.msra.mxu0 0
    %1759 = vmatprep.mubr.bf16.mxu0 0
    %1760 = vmatmul.mubr.bf16.gmra.mrb[0].mxu0 %v1725
    %v1761 = vpop.f32.mrb[0].mxu0
    %v1762 = vadd.f32 %v1710, %v1761
    %v1763 = vpop.f32.mrb[0].mxu0
    %v1764 = vpop.f32.mrb[0].mxu0
    %v1765 = vadd.f32 %v1710, %v1764
    %v1766 = vpop.f32.mrb[0].mxu0
    %1767 = vdwg.mxu0
    %1770 = vrot.lane.b32.xlu0 %v1406, 32
    %v1771 = vpop.permute.xlu0 %1770
    %1772 = vrot.lane.b32.xlu0 %v1407, 32
    %v1773 = vpop.permute.xlu0 %1772
    %1778 = vrot.lane.b32.xlu0 %v1604, 48
    %v1779 = vpop.permute.xlu0 %1778
    %1780 = vrot.lane.b32.xlu0 %v1605, 48
    %v1781 = vpop.permute.xlu0 %1780
    %v1784 = vsel %vm109, %v1762, %v1771
    %v1785 = vsel %vm109, %v1765, %v1773
    %vm1786 = vcmask 392192
    %v1787 = vsel %vm1786, %v1784, %v1779
    %v1788 = vsel %vm1786, %v1785, %v1781
    %vm1789 = vcmask 523264
    %v1790 = vsel %vm1789, %v1787, 0.0
    %v1791 = vsel %vm1789, %v1788, 0.0
    %1792 = vst [vmem:[%s13] sm:$0xff] %v1790
    %1793 = vst [vmem:[%s13 + $0x8] sm:$0xff] %v1791
    // Predicated region
    $region58: #{_convmodel_forward.1} parent=1 // pred_check
      _
    $region59: #{_convmodel_forward.1} parent=1 // pred_check_branch
      %1795 = sbr.rel (0) target = $region61
    $region60: #{_convmodel_forward.1} parent=1 // pred_region
      _
    $region61: #{_convmodel_forward.1} parent=1 // pred_fallthru
      _
    // Predicated region
    $region62: #{_convmodel_forward.1} parent=1 // pred_check
      _
    $region63: #{_convmodel_forward.1} parent=1 // pred_check_branch
      %1797 = sbr.rel (0) target = $region65
    $region64: #{_convmodel_forward.1} parent=1 // pred_region
      _
    $region65: #{_convmodel_forward.1} parent=1 // pred_fallthru
      _
    %1798 = vsyncpa [#allocation3], 1

</llo_original>
